<compile_context>
chip_gen: v7x
topology: tpu7x:2x2x1
jax: 0.10.0
libtpu: 0.0.40
codegen_flags: <defaults>
</compile_context>

<pallas_src>
import functools

import jax
import jax.numpy as jnp
import numpy as np
from jax.experimental import pallas as pl
from jax.experimental.pallas import tpu as pltpu

BN_EPS = 1e-5
_HALO = 128          # halo blocks are one 128-lane block wide (only one column is used)


def _vmem_limit_bytes():
    """Per-generation VMEM budget (bytes) for the pallas_call scoped limit."""
    try:
        cap = int(pltpu.get_tpu_info().vmem_capacity_bytes)
    except Exception:
        cap = 64 * 1024 * 1024            # conservative default (v7x per-core VMEM)
    return min((cap * 3) // 4, 96 * 1024 * 1024)


def _largest_tile(L, per_lane_bytes, budget, max_lt):
    """Largest lane tile (multiple of 128 dividing L, <= max_lt) fitting the VMEM budget."""
    best = 128
    d = 128
    top = min(L, max_lt)
    while d <= top:
        if L % d == 0 and per_lane_bytes * d <= budget:
            best = d
        d += 128
    return best


def _partial_stats(y):
    """Per-tile sum and sum-of-squares over the L axis; (Cout, 2) float32."""
    s = jnp.sum(y, axis=1, keepdims=True)
    ss = jnp.sum(y * y, axis=1, keepdims=True)
    return jnp.concatenate([s, ss], axis=1)


def _conv3_rolled(x, w_ref):
    """k=3 / pad=1 conv on a full-L tile.

    Three tap matmuls on the *unshifted* tile; the +-1 tap results are aligned with
    pltpu.roll (XLU) and the wrap-around column is replaced with the zero padding.
    x: (C, L) compute dtype;  w_ref: (3, Cout, C) Ref;  returns (Cout, L) float32.
    """
    lt = x.shape[-1]
    zm = jnp.dot(w_ref[0], x, preferred_element_type=jnp.float32)   # tap -1
    zc = jnp.dot(w_ref[1], x, preferred_element_type=jnp.float32)   # tap  0
    zp = jnp.dot(w_ref[2], x, preferred_element_type=jnp.float32)   # tap +1
    lane = jax.lax.broadcasted_iota(jnp.int32, zc.shape, 1)
    y = zc + jnp.where(lane == 0, 0.0, pltpu.roll(zm, 1, axis=1))
    return y + jnp.where(lane == lt - 1, 0.0, pltpu.roll(zp, lt - 1, axis=1))


def _conv3_halo(x, lcol, rcol, w_ref):
    """k=3 / pad=1 conv on an interior tile with explicit one-column halos.

    x: (C, Lt);  lcol/rcol: (C, 1) neighbour columns (already zeroed at sequence ends);
    w_ref: (3, Cout, C) Ref;  returns (Cout, Lt) float32.
    """
    lt = x.shape[-1]
    xm1 = jnp.concatenate([lcol, x[:, : lt - 1]], axis=1)   # col l -> x[:, l-1]
    xp1 = jnp.concatenate([x[:, 1:], rcol], axis=1)         # col l -> x[:, l+1]
    y = jnp.dot(w_ref[0], xm1, preferred_element_type=jnp.float32)
    y = y + jnp.dot(w_ref[1], x, preferred_element_type=jnp.float32)
    return y + jnp.dot(w_ref[2], xp1, preferred_element_type=jnp.float32)


# ------------------------------ full-L fast-path kernels -----------------------------------

def _conv1_full_kernel(x_ref, w_ref, y_ref, st_ref):
    x = x_ref[0].astype(w_ref.dtype)
    y = _conv3_rolled(x, w_ref)
    y_ref[0] = y.astype(y_ref.dtype)
    st_ref[0, 0] = _partial_stats(y)


def _conv2_full_kernel(y1_ref, sc_ref, sh_ref, w_ref, y2_ref, st_ref):
    h = jnp.maximum(y1_ref[0].astype(jnp.float32) * sc_ref[...] + sh_ref[...], 0.0)
    y = _conv3_rolled(h.astype(w_ref.dtype), w_ref)
    y2_ref[0] = y.astype(y2_ref.dtype)
    st_ref[0, 0] = _partial_stats(y)


# ------------------------------ tiled (halo) fallback kernels ------------------------------

def _conv1_tiled_kernel(x_ref, xl_ref, xr_ref, w_ref, y_ref, st_ref):
    j = pl.program_id(1)
    nj = pl.num_programs(1)
    cdt = w_ref.dtype
    x = x_ref[0].astype(cdt)
    lcol = xl_ref[0, :, _HALO - 1:_HALO].astype(cdt)
    rcol = xr_ref[0, :, 0:1].astype(cdt)
    lcol = jnp.where(j == 0, jnp.zeros_like(lcol), lcol)          # zero pad at l = 0
    rcol = jnp.where(j == nj - 1, jnp.zeros_like(rcol), rcol)     # zero pad at l = L-1
    y = _conv3_halo(x, lcol, rcol, w_ref)
    y_ref[0] = y.astype(y_ref.dtype)
    st_ref[0, 0] = _partial_stats(y)


def _conv2_tiled_kernel(y1_ref, yl_ref, yr_ref, sc_ref, sh_ref, w_ref, y2_ref, st_ref):
    j = pl.program_id(1)
    nj = pl.num_programs(1)
    cdt = w_ref.dtype
    scale = sc_ref[...]                                   # (C, 1) f32
    shift = sh_ref[...]                                   # (C, 1) f32
    h = jnp.maximum(y1_ref[0].astype(jnp.float32) * scale + shift, 0.0)
    hl = jnp.maximum(yl_ref[0, :, _HALO - 1:_HALO].astype(jnp.float32) * scale + shift, 0.0)
    hr = jnp.maximum(yr_ref[0, :, 0:1].astype(jnp.float32) * scale + shift, 0.0)
    hl = jnp.where(j == 0, jnp.zeros_like(hl), hl)        # conv2 zero-pads h at l = 0
    hr = jnp.where(j == nj - 1, jnp.zeros_like(hr), hr)   # ... and at l = L-1
    y = _conv3_halo(h.astype(cdt), hl.astype(cdt), hr.astype(cdt), w_ref)
    y2_ref[0] = y.astype(y2_ref.dtype)
    st_ref[0, 0] = _partial_stats(y)


# ------------------------------ elementwise epilogue ---------------------------------------

def _bn2_add_relu_kernel(y2_ref, x_ref, sc_ref, sh_ref, o_ref):
    y2 = y2_ref[0].astype(jnp.float32)
    x = x_ref[0].astype(jnp.float32)
    out = jnp.maximum(y2 * sc_ref[...] + sh_ref[...] + x, 0.0)
    o_ref[0] = out.astype(o_ref.dtype)


def _fold_bn(stats, g, b, count):
    """Reduce per-tile stats and fold BN into per-channel (scale, shift), shape (C, 1) f32."""
    s = jnp.sum(stats[..., 0], axis=(0, 1))                   # (C,)
    ss = jnp.sum(stats[..., 1], axis=(0, 1))                  # (C,)
    mean = s / count
    var = jnp.maximum(ss / count - mean * mean, 0.0)          # biased (training-mode) var
    scale = g.astype(jnp.float32) * jax.lax.rsqrt(var + BN_EPS)
    shift = b.astype(jnp.float32) - mean * scale
    c = scale.shape[0]
    return scale.reshape(c, 1), shift.reshape(c, 1)


@functools.partial(jax.jit, static_argnames=("interm_dtype", "max_l_tile"))
def basic_block_1d(x, w1_pt, g1, b1, w2_pt, g2, b2, *,
                   interm_dtype=jnp.bfloat16, max_l_tile=None):
    """BasicBlock1D forward. x: (N, C, L); conv weights in PyTorch (Cout, Cin, 3) layout."""
    N, C, L = x.shape
    Cout = w1_pt.shape[0]
    if Cout != C:
        raise ValueError("stride=1 / downsample=None requires planes == inplanes")
    # TODO(synk): stride != 1 and the optional `downsample` branch of BasicBlock1D are not
    # implemented (the module's defaults stride=1, downsample=None are assumed).
    if L % 128 != 0:
        raise ValueError("L must be a multiple of 128 (lane-dense L tiling)")

    cdt = jnp.dtype(interm_dtype)          # intermediate / MXU compute dtype (bf16 default)
    in_b = np.dtype(x.dtype).itemsize
    cd_b = cdt.itemsize

    # Per-generation VMEM budget and tile sizes (v5e/v6e: 128 MiB VMEM, v7x: 64 MiB).
    vmem_limit = _vmem_limit_bytes()
    conv_factor = C * (2 * in_b + 6 * cd_b + 24)      # conv-pass working set per lane
    ew_factor = C * (4 * in_b + 2 * cd_b + 16)        # elementwise-pass working set per lane
    max_lt = L
    if max_l_tile is not None:
        max_lt = min(max_lt, int(max_l_tile))
    if N == 1 and L >= 256 and max_lt == L:
        max_lt = L // 2                               # keep >= 2 parallel tiles for v7x's 2 TCs
    lt = _largest_tile(L, conv_factor, vmem_limit, max_lt)
    lt3 = _largest_tile(L, ew_factor, vmem_limit, L if max_l_tile is None else max_lt)
    use_full = lt == L
    n_lt = L // lt

    # Weights: PyTorch (Cout, Cin, 3) -> (3, Cout, Cin): one clean (Cout, Cin) slab per tap.
    w1 = jnp.transpose(w1_pt, (2, 0, 1)).astype(cdt)
    w2 = jnp.transpose(w2_pt, (2, 0, 1)).astype(cdt)
    count = float(N * L)

    conv_cost = pl.CostEstimate(
        flops=2 * N * L * 3 * C * Cout, transcendentals=0,
        bytes_accessed=N * C * L * (in_b + cd_b) + 3 * C * Cout * cd_b
        + N * n_lt * Cout * 2 * 4)
    ew_cost = pl.CostEstimate(
        flops=3 * N * C * L, transcendentals=0,
        bytes_accessed=N * C * L * (2 * in_b + cd_b))

    y_shape = jax.ShapeDtypeStruct((N, Cout, L), cdt)
    st_shape = jax.ShapeDtypeStruct((N, n_lt, Cout, 2), jnp.float32)
    out_shape = jax.ShapeDtypeStruct((N, C, L), x.dtype)

    # TODO(synk): on v5e (HBM-bound) pass 2 could emit only stats and pass 3 recompute
    # bn1+relu+conv2 from y1, saving the y2 HBM round-trip at the cost of an extra matmul.

    if use_full:
        # ---- fast path: one full-L block per batch element, no halo DMA streams --------
        grid = (N,)
        act_spec = pl.BlockSpec((1, C, L), lambda n: (n, 0, 0))
        w_spec = pl.BlockSpec((3, Cout, C), lambda n: (0, 0, 0))
        vec_spec = pl.BlockSpec((C, 1), lambda n: (0, 0))
        st_spec = pl.BlockSpec((1, 1, Cout, 2), lambda n: (n, 0, 0, 0))
        cparams = pltpu.CompilerParams(
            dimension_semantics=("parallel",), vmem_limit_bytes=vmem_limit)

        y1, st1 = pl.pallas_call(
            _conv1_full_kernel, out_shape=(y_shape, st_shape), grid=grid,
            in_specs=[act_spec, w_spec], out_specs=(act_spec, st_spec),
            compiler_params=cparams, cost_estimate=conv_cost,
        )(x, w1)
        scale1, shift1 = _fold_bn(st1, g1, b1, count)

        y2, st2 = pl.pallas_call(
            _conv2_full_kernel, out_shape=(y_shape, st_shape), grid=grid,
            in_specs=[act_spec, vec_spec, vec_spec, w_spec],
            out_specs=(act_spec, st_spec),
            compiler_params=cparams, cost_estimate=conv_cost,
        )(y1, scale1, shift1, w2)
        scale2, shift2 = _fold_bn(st2, g2, b2, count)

        out = pl.pallas_call(
            _bn2_add_relu_kernel, out_shape=out_shape, grid=grid,
            in_specs=[act_spec, act_spec, vec_spec, vec_spec], out_specs=act_spec,
            compiler_params=cparams, cost_estimate=ew_cost,
        )(y2, x, scale2, shift2)
        return out

    # ---- tiled fallback: halo blocks + boundary masking --------------------------------
    sub = lt // _HALO
    n_lb = L // _HALO
    grid = (N, n_lt)
    act_spec = pl.BlockSpec((1, C, lt), lambda n, j: (n, 0, j))
    halo_l_spec = pl.BlockSpec(
        (1, C, _HALO), lambda n, j: (n, 0, jnp.maximum(j * sub - 1, 0)))
    halo_r_spec = pl.BlockSpec(
        (1, C, _HALO), lambda n, j: (n, 0, jnp.minimum((j + 1) * sub, n_lb - 1)))
    w_spec = pl.BlockSpec((3, Cout, C), lambda n, j: (0, 0, 0))
    vec_spec = pl.BlockSpec((C, 1), lambda n, j: (0, 0))
    st_spec = pl.BlockSpec((1, 1, Cout, 2), lambda n, j: (n, j, 0, 0))
    cparams = pltpu.CompilerParams(
        dimension_semantics=("parallel", "parallel"), vmem_limit_bytes=vmem_limit)

    y1, st1 = pl.pallas_call(
        _conv1_tiled_kernel, out_shape=(y_shape, st_shape), grid=grid,
        in_specs=[act_spec, halo_l_spec, halo_r_spec, w_spec],
        out_specs=(act_spec, st_spec),
        compiler_params=cparams, cost_estimate=conv_cost,
    )(x, x, x, w1)
    scale1, shift1 = _fold_bn(st1, g1, b1, count)

    y2, st2 = pl.pallas_call(
        _conv2_tiled_kernel, out_shape=(y_shape, st_shape), grid=grid,
        in_specs=[act_spec, halo_l_spec, halo_r_spec, vec_spec, vec_spec, w_spec],
        out_specs=(act_spec, st_spec),
        compiler_params=cparams, cost_estimate=conv_cost,
    )(y1, y1, y1, scale1, shift1, w2)
    scale2, shift2 = _fold_bn(st2, g2, b2, count)

    # Pass 3 has no halos / matmuls, so it gets its own (bigger) lane tile.
    grid3 = (N, L // lt3)
    act3_spec = pl.BlockSpec((1, C, lt3), lambda n, j: (n, 0, j))
    vec3_spec = pl.BlockSpec((C, 1), lambda n, j: (0, 0))
    out = pl.pallas_call(
        _bn2_add_relu_kernel, out_shape=out_shape, grid=grid3,
        in_specs=[act3_spec, act3_spec, vec3_spec, vec3_spec], out_specs=act3_spec,
        compiler_params=cparams, cost_estimate=ew_cost,
    )(y2, x, scale2, shift2)
    return out


def ref_forward(x, w1_pt, g1, b1, w2_pt, g2, b2):
    """Pure-JAX reference matching the PyTorch forward (training-mode BN)."""
    def conv1d(v, w):
        return jax.lax.conv_general_dilated(
            v, w, window_strides=(1,), padding=((1, 1),),
            dimension_numbers=("NCH", "OIH", "NCH"))

    def bn(v, g, b):
        mean = v.mean(axis=(0, 2), keepdims=True)
        var = ((v - mean) ** 2).mean(axis=(0, 2), keepdims=True)
        return (v - mean) / jnp.sqrt(var + BN_EPS) * g[None, :, None] + b[None, :, None]

    out = jax.nn.relu(bn(conv1d(x, w1_pt), g1, b1))
    out = bn(conv1d(out, w2_pt), g2, b2)
    return jax.nn.relu(out + x)


if __name__ == "__main__":
    N, C, L = 2, 8, 256            # inplanes = planes = 8, stride = 1
    key = jax.random.PRNGKey(0)
    kx, k1, k2, kg1, kb1, kg2, kb2 = jax.random.split(key, 7)

    x = jax.random.normal(kx, (N, C, L), dtype=jnp.float32)
    # Conv weights in PyTorch layout (Cout, Cin, 3), kaiming-ish scale.
    w1_pt = jax.random.normal(k1, (C, C, 3), dtype=jnp.float32) * (1.0 / np.sqrt(3 * C))
    w2_pt = jax.random.normal(k2, (C, C, 3), dtype=jnp.float32) * (1.0 / np.sqrt(3 * C))
    # Non-trivial BN affine params to exercise the folded scale/shift path.
    g1 = 1.0 + 0.1 * jax.random.normal(kg1, (C,), dtype=jnp.float32)
    b1 = 0.1 * jax.random.normal(kb1, (C,), dtype=jnp.float32)
    g2 = 1.0 + 0.1 * jax.random.normal(kg2, (C,), dtype=jnp.float32)
    b2 = 0.1 * jax.random.normal(kb2, (C,), dtype=jnp.float32)

    ref = jax.block_until_ready(ref_forward(x, w1_pt, g1, b1, w2_pt, g2, b2))

    # 1) Full-L fast path with exact (f32) intermediates: tight correctness check.
    out_f32 = jax.block_until_ready(
        basic_block_1d(x, w1_pt, g1, b1, w2_pt, g2, b2, interm_dtype=jnp.float32))
    np.testing.assert_allclose(np.asarray(out_f32), np.asarray(ref), rtol=1e-4, atol=1e-4)

    # 2) Tiled halo fallback (forced 128-lane tiles): exercises halo loads, boundary
    #    masking and the cross-tile BN stats reduction.
    out_tiled = jax.block_until_ready(
        basic_block_1d(x, w1_pt, g1, b1, w2_pt, g2, b2,
                       interm_dtype=jnp.float32, max_l_tile=128))
    np.testing.assert_allclose(np.asarray(out_tiled), np.asarray(ref), rtol=1e-4, atol=1e-4)

    # 3) Default perf configuration: bf16 intermediates / bf16 MXU operands with f32
    #    accumulation (expected small rounding mismatch vs the f32 reference).
    out_bf16 = jax.block_until_ready(basic_block_1d(x, w1_pt, g1, b1, w2_pt, g2, b2))
    np.testing.assert_allclose(np.asarray(out_bf16), np.asarray(ref), rtol=5e-2, atol=1e-1)

    print("KERNEL_OK")
</pallas_src>

<mosaic_0001>
module attributes {stable_mosaic.version = 11 : i64} {
  func.func @_conv1_full_kernel(%arg0: i32, %arg1: memref<1x8x256xf32, #tpu.memory_space<vmem>>, %arg2: memref<3x8x8xf32, #tpu.memory_space<vmem>>, %arg3: memref<1x8x256xf32, #tpu.memory_space<vmem>>, %arg4: memref<1x1x8x2xf32, #tpu.memory_space<vmem>>) attributes {dimension_semantics = [#tpu.dimension_semantics<parallel>], iteration_bounds = array<i64: 2>, scalar_prefetch = 0 : i64, scratch_operands = 0 : i64, tpu.core_type = #tpu.core_type<tc>, window_params = [{transform_indices = @transform_0, window_bounds = array<i64: 1, 8, 256>}, {pipeline_mode = #tpu.pipeline_mode<synchronous>, transform_indices = @transform_1, window_bounds = array<i64: 3, 8, 8>}, {transform_indices = @transform_2, window_bounds = array<i64: 1, 8, 256>}, {transform_indices = @transform_3, window_bounds = array<i64: 1, 1, 8, 2>}]} {
    %c0 = arith.constant 0 : index
    %c0_0 = arith.constant 0 : index
    %c0_1 = arith.constant 0 : index
    %0 = vector.load %arg1[%c0, %c0_0, %c0_1] : memref<1x8x256xf32, #tpu.memory_space<vmem>>, vector<1x8x256xf32>
    %1 = vector.shape_cast %0 : vector<1x8x256xf32> to vector<8x256xf32>
    %c0_2 = arith.constant 0 : index
    %c0_3 = arith.constant 0 : index
    %c0_4 = arith.constant 0 : index
    %2 = vector.load %arg2[%c0_2, %c0_3, %c0_4] : memref<3x8x8xf32, #tpu.memory_space<vmem>>, vector<1x8x8xf32>
    %3 = vector.shape_cast %2 : vector<1x8x8xf32> to vector<8x8xf32>
    %cst = arith.constant dense<0.000000e+00> : vector<8x256xf32>
    %4 = tpu.matmul %3, %1, %cst {dimension_numbers = #tpu.dot_dimension_numbers<[1], [0], [0], [1], [0, 0, 1, 1], [], []>} : vector<8x8xf32>, vector<8x256xf32>, vector<8x256xf32> -> vector<8x256xf32>
    %c1 = arith.constant 1 : index
    %c0_5 = arith.constant 0 : index
    %c0_6 = arith.constant 0 : index
    %5 = vector.load %arg2[%c1, %c0_5, %c0_6] : memref<3x8x8xf32, #tpu.memory_space<vmem>>, vector<1x8x8xf32>
    %6 = vector.shape_cast %5 : vector<1x8x8xf32> to vector<8x8xf32>
    %cst_7 = arith.constant dense<0.000000e+00> : vector<8x256xf32>
    %7 = tpu.matmul %6, %1, %cst_7 {dimension_numbers = #tpu.dot_dimension_numbers<[1], [0], [0], [1], [0, 0, 1, 1], [], []>} : vector<8x8xf32>, vector<8x256xf32>, vector<8x256xf32> -> vector<8x256xf32>
    %c2 = arith.constant 2 : index
    %c0_8 = arith.constant 0 : index
    %c0_9 = arith.constant 0 : index
    %8 = vector.load %arg2[%c2, %c0_8, %c0_9] : memref<3x8x8xf32, #tpu.memory_space<vmem>>, vector<1x8x8xf32>
    %9 = vector.shape_cast %8 : vector<1x8x8xf32> to vector<8x8xf32>
    %cst_10 = arith.constant dense<0.000000e+00> : vector<8x256xf32>
    %10 = tpu.matmul %9, %1, %cst_10 {dimension_numbers = #tpu.dot_dimension_numbers<[1], [0], [0], [1], [0, 0, 1, 1], [], []>} : vector<8x8xf32>, vector<8x256xf32>, vector<8x256xf32> -> vector<8x256xf32>
    %11 = tpu.iota {dimensions = array<i32: 1>} : vector<8x256xi32>
    %c0_i32 = arith.constant 0 : i32
    %12 = vector.broadcast %c0_i32 : i32 to vector<8x256xi32>
    %13 = arith.cmpi eq, %11, %12 : vector<8x256xi32>
    %c1_i32 = arith.constant 1 : i32
    %14 = tpu.dynamic_rotate %4 by %c1_i32 dim 1 : vector<8x256xf32>, i32 -> vector<8x256xf32>
    %cst_11 = arith.constant 0.000000e+00 : f32
    %15 = vector.broadcast %cst_11 : f32 to vector<8x256xf32>
    %16 = arith.select %13, %15, %14 : vector<8x256xi1>, vector<8x256xf32>
    %17 = arith.addf %7, %16 : vector<8x256xf32>
    %c255_i32 = arith.constant 255 : i32
    %18 = vector.broadcast %c255_i32 : i32 to vector<8x256xi32>
    %19 = arith.cmpi eq, %11, %18 : vector<8x256xi32>
    %c255_i32_12 = arith.constant 255 : i32
    %20 = tpu.dynamic_rotate %10 by %c255_i32_12 dim 1 : vector<8x256xf32>, i32 -> vector<8x256xf32>
    %cst_13 = arith.constant 0.000000e+00 : f32
    %21 = vector.broadcast %cst_13 : f32 to vector<8x256xf32>
    %22 = arith.select %19, %21, %20 : vector<8x256xi1>, vector<8x256xf32>
    %23 = arith.addf %17, %22 : vector<8x256xf32>
    %c0_14 = arith.constant 0 : index
    %c0_15 = arith.constant 0 : index
    %c0_16 = arith.constant 0 : index
    %24 = vector.load %arg3[%c0_14, %c0_15, %c0_16] : memref<1x8x256xf32, #tpu.memory_space<vmem>>, vector<1x8x256xf32>
    %25 = vector.shape_cast %24 : vector<1x8x256xf32> to vector<8x256xf32>
    %26 = vector.shape_cast %23 : vector<8x256xf32> to vector<1x8x256xf32>
    tpu.vector_store %arg3[%c0_14, %c0_15, %c0_16], %26 {strides = array<i32>} : memref<1x8x256xf32, #tpu.memory_space<vmem>>, vector<1x8x256xf32>,
    %cst_17 = arith.constant dense<0.000000e+00> : vector<8xf32>
    %27 = vector.multi_reduction <add>, %23, %cst_17 [1] : vector<8x256xf32> to vector<8xf32>
    %28 = vector.shape_cast %27 : vector<8xf32> to vector<8x1xf32>
    %29 = arith.mulf %23, %23 : vector<8x256xf32>
    %cst_18 = arith.constant dense<0.000000e+00> : vector<8xf32>
    %30 = vector.multi_reduction <add>, %29, %cst_18 [1] : vector<8x256xf32> to vector<8xf32>
    %31 = vector.shape_cast %30 : vector<8xf32> to vector<8x1xf32>
    %32 = tpu.concatenate %28, %31 in 1 : vector<8x1xf32>, vector<8x1xf32> -> vector<8x2xf32>
    %c0_19 = arith.constant 0 : index
    %c0_20 = arith.constant 0 : index
    %c0_21 = arith.constant 0 : index
    %c0_22 = arith.constant 0 : index
    %33 = vector.load %arg4[%c0_19, %c0_20, %c0_21, %c0_22] : memref<1x1x8x2xf32, #tpu.memory_space<vmem>>, vector<1x1x8x2xf32>
    %34 = vector.shape_cast %33 : vector<1x1x8x2xf32> to vector<8x2xf32>
    %35 = vector.shape_cast %32 : vector<8x2xf32> to vector<1x1x8x2xf32>
    tpu.vector_store %arg4[%c0_19, %c0_20, %c0_21, %c0_22], %35 {strides = array<i32>} : memref<1x1x8x2xf32, #tpu.memory_space<vmem>>, vector<1x1x8x2xf32>,
    return
  }
  func.func @transform_0(%arg0: i32) -> (i32, i32, i32) {
    %c0_i32 = arith.constant 0 : i32
    %c0_i32_0 = arith.constant 0 : i32
    %c0_i32_1 = arith.constant 0 : i32
    return %arg0, %c0_i32, %c0_i32_0 : i32, i32, i32
  }
  func.func @transform_1(%arg0: i32) -> (i32, i32, i32) {
    %c0_i32 = arith.constant 0 : i32
    %c0_i32_0 = arith.constant 0 : i32
    %c0_i32_1 = arith.constant 0 : i32
    %c0_i32_2 = arith.constant 0 : i32
    return %c0_i32, %c0_i32_0, %c0_i32_1 : i32, i32, i32
  }
  func.func @transform_2(%arg0: i32) -> (i32, i32, i32) {
    %c0_i32 = arith.constant 0 : i32
    %c0_i32_0 = arith.constant 0 : i32
    %c0_i32_1 = arith.constant 0 : i32
    return %arg0, %c0_i32, %c0_i32_0 : i32, i32, i32
  }
  func.func @transform_3(%arg0: i32) -> (i32, i32, i32, i32) {
    %c0_i32 = arith.constant 0 : i32
    %c0_i32_0 = arith.constant 0 : i32
    %c0_i32_1 = arith.constant 0 : i32
    %c0_i32_2 = arith.constant 0 : i32
    return %arg0, %c0_i32, %c0_i32_0, %c0_i32_1 : i32, i32, i32, i32
  }
}

module attributes {stable_mosaic.version = 11 : i64} {
  func.func @_bn2_add_relu_kernel(%arg0: i32, %arg1: memref<1x8x256xf32, #tpu.memory_space<vmem>>, %arg2: memref<1x8x256xf32, #tpu.memory_space<vmem>>, %arg3: memref<8x1xf32, #tpu.memory_space<vmem>>, %arg4: memref<8x1xf32, #tpu.memory_space<vmem>>, %arg5: memref<1x8x256xf32, #tpu.memory_space<vmem>>) attributes {dimension_semantics = [#tpu.dimension_semantics<parallel>], iteration_bounds = array<i64: 2>, scalar_prefetch = 0 : i64, scratch_operands = 0 : i64, tpu.core_type = #tpu.core_type<tc>, window_params = [{transform_indices = @transform_0, window_bounds = array<i64: 1, 8, 256>}, {transform_indices = @transform_1, window_bounds = array<i64: 1, 8, 256>}, {pipeline_mode = #tpu.pipeline_mode<synchronous>, transform_indices = @transform_2, window_bounds = array<i64: 8, 1>}, {pipeline_mode = #tpu.pipeline_mode<synchronous>, transform_indices = @transform_3, window_bounds = array<i64: 8, 1>}, {transform_indices = @transform_4, window_bounds = array<i64: 1, 8, 256>}]} {
    %c0 = arith.constant 0 : index
    %c0_0 = arith.constant 0 : index
    %c0_1 = arith.constant 0 : index
    %0 = vector.load %arg1[%c0, %c0_0, %c0_1] : memref<1x8x256xf32, #tpu.memory_space<vmem>>, vector<1x8x256xf32>
    %1 = vector.shape_cast %0 : vector<1x8x256xf32> to vector<8x256xf32>
    %c0_2 = arith.constant 0 : index
    %c0_3 = arith.constant 0 : index
    %c0_4 = arith.constant 0 : index
    %2 = vector.load %arg2[%c0_2, %c0_3, %c0_4] : memref<1x8x256xf32, #tpu.memory_space<vmem>>, vector<1x8x256xf32>
    %3 = vector.shape_cast %2 : vector<1x8x256xf32> to vector<8x256xf32>
    %c0_5 = arith.constant 0 : index
    %c0_6 = arith.constant 0 : index
    %4 = vector.load %arg3[%c0_5, %c0_6] : memref<8x1xf32, #tpu.memory_space<vmem>>, vector<8x1xf32>
    %5 = vector.broadcast %4 : vector<8x1xf32> to vector<8x256xf32>
    %6 = arith.mulf %1, %5 : vector<8x256xf32>
    %c0_7 = arith.constant 0 : index
    %c0_8 = arith.constant 0 : index
    %7 = vector.load %arg4[%c0_7, %c0_8] : memref<8x1xf32, #tpu.memory_space<vmem>>, vector<8x1xf32>
    %8 = vector.broadcast %7 : vector<8x1xf32> to vector<8x256xf32>
    %9 = arith.addf %6, %8 : vector<8x256xf32>
    %10 = arith.addf %9, %3 : vector<8x256xf32>
    %cst = arith.constant 0.000000e+00 : f32
    %11 = vector.broadcast %cst : f32 to vector<8x256xf32>
    %12 = arith.maximumf %10, %11 : vector<8x256xf32>
    %c0_9 = arith.constant 0 : index
    %c0_10 = arith.constant 0 : index
    %c0_11 = arith.constant 0 : index
    %13 = vector.load %arg5[%c0_9, %c0_10, %c0_11] : memref<1x8x256xf32, #tpu.memory_space<vmem>>, vector<1x8x256xf32>
    %14 = vector.shape_cast %13 : vector<1x8x256xf32> to vector<8x256xf32>
    %15 = vector.shape_cast %12 : vector<8x256xf32> to vector<1x8x256xf32>
    tpu.vector_store %arg5[%c0_9, %c0_10, %c0_11], %15 {strides = array<i32>} : memref<1x8x256xf32, #tpu.memory_space<vmem>>, vector<1x8x256xf32>,
    return
  }
  func.func @transform_0(%arg0: i32) -> (i32, i32, i32) {
    %c0_i32 = arith.constant 0 : i32
    %c0_i32_0 = arith.constant 0 : i32
    %c0_i32_1 = arith.constant 0 : i32
    return %arg0, %c0_i32, %c0_i32_0 : i32, i32, i32
  }
  func.func @transform_1(%arg0: i32) -> (i32, i32, i32) {
    %c0_i32 = arith.constant 0 : i32
    %c0_i32_0 = arith.constant 0 : i32
    %c0_i32_1 = arith.constant 0 : i32
    return %arg0, %c0_i32, %c0_i32_0 : i32, i32, i32
  }
  func.func @transform_2(%arg0: i32) -> (i32, i32) {
    %c0_i32 = arith.constant 0 : i32
    %c0_i32_0 = arith.constant 0 : i32
    %c0_i32_1 = arith.constant 0 : i32
    return %c0_i32, %c0_i32_0 : i32, i32
  }
  func.func @transform_3(%arg0: i32) -> (i32, i32) {
    %c0_i32 = arith.constant 0 : i32
    %c0_i32_0 = arith.constant 0 : i32
    %c0_i32_1 = arith.constant 0 : i32
    return %c0_i32, %c0_i32_0 : i32, i32
  }
  func.func @transform_4(%arg0: i32) -> (i32, i32, i32) {
    %c0_i32 = arith.constant 0 : i32
    %c0_i32_0 = arith.constant 0 : i32
    %c0_i32_1 = arith.constant 0 : i32
    return %arg0, %c0_i32, %c0_i32_0 : i32, i32, i32
  }
}

module attributes {stable_mosaic.version = 11 : i64} {
  func.func @_conv2_full_kernel(%arg0: i32, %arg1: memref<1x8x256xf32, #tpu.memory_space<vmem>>, %arg2: memref<8x1xf32, #tpu.memory_space<vmem>>, %arg3: memref<8x1xf32, #tpu.memory_space<vmem>>, %arg4: memref<3x8x8xf32, #tpu.memory_space<vmem>>, %arg5: memref<1x8x256xf32, #tpu.memory_space<vmem>>, %arg6: memref<1x1x8x2xf32, #tpu.memory_space<vmem>>) attributes {dimension_semantics = [#tpu.dimension_semantics<parallel>], iteration_bounds = array<i64: 2>, scalar_prefetch = 0 : i64, scratch_operands = 0 : i64, tpu.core_type = #tpu.core_type<tc>, window_params = [{transform_indices = @transform_0, window_bounds = array<i64: 1, 8, 256>}, {pipeline_mode = #tpu.pipeline_mode<synchronous>, transform_indices = @transform_1, window_bounds = array<i64: 8, 1>}, {pipeline_mode = #tpu.pipeline_mode<synchronous>, transform_indices = @transform_2, window_bounds = array<i64: 8, 1>}, {pipeline_mode = #tpu.pipeline_mode<synchronous>, transform_indices = @transform_3, window_bounds = array<i64: 3, 8, 8>}, {transform_indices = @transform_4, window_bounds = array<i64: 1, 8, 256>}, {transform_indices = @transform_5, window_bounds = array<i64: 1, 1, 8, 2>}]} {
    %c0 = arith.constant 0 : index
    %c0_0 = arith.constant 0 : index
    %c0_1 = arith.constant 0 : index
    %0 = vector.load %arg1[%c0, %c0_0, %c0_1] : memref<1x8x256xf32, #tpu.memory_space<vmem>>, vector<1x8x256xf32>
    %1 = vector.shape_cast %0 : vector<1x8x256xf32> to vector<8x256xf32>
    %c0_2 = arith.constant 0 : index
    %c0_3 = arith.constant 0 : index
    %2 = vector.load %arg2[%c0_2, %c0_3] : memref<8x1xf32, #tpu.memory_space<vmem>>, vector<8x1xf32>
    %3 = vector.broadcast %2 : vector<8x1xf32> to vector<8x256xf32>
    %4 = arith.mulf %1, %3 : vector<8x256xf32>
    %c0_4 = arith.constant 0 : index
    %c0_5 = arith.constant 0 : index
    %5 = vector.load %arg3[%c0_4, %c0_5] : memref<8x1xf32, #tpu.memory_space<vmem>>, vector<8x1xf32>
    %6 = vector.broadcast %5 : vector<8x1xf32> to vector<8x256xf32>
    %7 = arith.addf %4, %6 : vector<8x256xf32>
    %cst = arith.constant 0.000000e+00 : f32
    %8 = vector.broadcast %cst : f32 to vector<8x256xf32>
    %9 = arith.maximumf %7, %8 : vector<8x256xf32>
    %c0_6 = arith.constant 0 : index
    %c0_7 = arith.constant 0 : index
    %c0_8 = arith.constant 0 : index
    %10 = vector.load %arg4[%c0_6, %c0_7, %c0_8] : memref<3x8x8xf32, #tpu.memory_space<vmem>>, vector<1x8x8xf32>
    %11 = vector.shape_cast %10 : vector<1x8x8xf32> to vector<8x8xf32>
    %cst_9 = arith.constant dense<0.000000e+00> : vector<8x256xf32>
    %12 = tpu.matmul %11, %9, %cst_9 {dimension_numbers = #tpu.dot_dimension_numbers<[1], [0], [0], [1], [0, 0, 1, 1], [], []>} : vector<8x8xf32>, vector<8x256xf32>, vector<8x256xf32> -> vector<8x256xf32>
    %c1 = arith.constant 1 : index
    %c0_10 = arith.constant 0 : index
    %c0_11 = arith.constant 0 : index
    %13 = vector.load %arg4[%c1, %c0_10, %c0_11] : memref<3x8x8xf32, #tpu.memory_space<vmem>>, vector<1x8x8xf32>
    %14 = vector.shape_cast %13 : vector<1x8x8xf32> to vector<8x8xf32>
    %cst_12 = arith.constant dense<0.000000e+00> : vector<8x256xf32>
    %15 = tpu.matmul %14, %9, %cst_12 {dimension_numbers = #tpu.dot_dimension_numbers<[1], [0], [0], [1], [0, 0, 1, 1], [], []>} : vector<8x8xf32>, vector<8x256xf32>, vector<8x256xf32> -> vector<8x256xf32>
    %c2 = arith.constant 2 : index
    %c0_13 = arith.constant 0 : index
    %c0_14 = arith.constant 0 : index
    %16 = vector.load %arg4[%c2, %c0_13, %c0_14] : memref<3x8x8xf32, #tpu.memory_space<vmem>>, vector<1x8x8xf32>
    %17 = vector.shape_cast %16 : vector<1x8x8xf32> to vector<8x8xf32>
    %cst_15 = arith.constant dense<0.000000e+00> : vector<8x256xf32>
    %18 = tpu.matmul %17, %9, %cst_15 {dimension_numbers = #tpu.dot_dimension_numbers<[1], [0], [0], [1], [0, 0, 1, 1], [], []>} : vector<8x8xf32>, vector<8x256xf32>, vector<8x256xf32> -> vector<8x256xf32>
    %19 = tpu.iota {dimensions = array<i32: 1>} : vector<8x256xi32>
    %c0_i32 = arith.constant 0 : i32
    %20 = vector.broadcast %c0_i32 : i32 to vector<8x256xi32>
    %21 = arith.cmpi eq, %19, %20 : vector<8x256xi32>
    %c1_i32 = arith.constant 1 : i32
    %22 = tpu.dynamic_rotate %12 by %c1_i32 dim 1 : vector<8x256xf32>, i32 -> vector<8x256xf32>
    %cst_16 = arith.constant 0.000000e+00 : f32
    %23 = vector.broadcast %cst_16 : f32 to vector<8x256xf32>
    %24 = arith.select %21, %23, %22 : vector<8x256xi1>, vector<8x256xf32>
    %25 = arith.addf %15, %24 : vector<8x256xf32>
    %c255_i32 = arith.constant 255 : i32
    %26 = vector.broadcast %c255_i32 : i32 to vector<8x256xi32>
    %27 = arith.cmpi eq, %19, %26 : vector<8x256xi32>
    %c255_i32_17 = arith.constant 255 : i32
    %28 = tpu.dynamic_rotate %18 by %c255_i32_17 dim 1 : vector<8x256xf32>, i32 -> vector<8x256xf32>
    %cst_18 = arith.constant 0.000000e+00 : f32
    %29 = vector.broadcast %cst_18 : f32 to vector<8x256xf32>
    %30 = arith.select %27, %29, %28 : vector<8x256xi1>, vector<8x256xf32>
    %31 = arith.addf %25, %30 : vector<8x256xf32>
    %c0_19 = arith.constant 0 : index
    %c0_20 = arith.constant 0 : index
    %c0_21 = arith.constant 0 : index
    %32 = vector.load %arg5[%c0_19, %c0_20, %c0_21] : memref<1x8x256xf32, #tpu.memory_space<vmem>>, vector<1x8x256xf32>
    %33 = vector.shape_cast %32 : vector<1x8x256xf32> to vector<8x256xf32>
    %34 = vector.shape_cast %31 : vector<8x256xf32> to vector<1x8x256xf32>
    tpu.vector_store %arg5[%c0_19, %c0_20, %c0_21], %34 {strides = array<i32>} : memref<1x8x256xf32, #tpu.memory_space<vmem>>, vector<1x8x256xf32>,
    %cst_22 = arith.constant dense<0.000000e+00> : vector<8xf32>
    %35 = vector.multi_reduction <add>, %31, %cst_22 [1] : vector<8x256xf32> to vector<8xf32>
    %36 = vector.shape_cast %35 : vector<8xf32> to vector<8x1xf32>
    %37 = arith.mulf %31, %31 : vector<8x256xf32>
    %cst_23 = arith.constant dense<0.000000e+00> : vector<8xf32>
    %38 = vector.multi_reduction <add>, %37, %cst_23 [1] : vector<8x256xf32> to vector<8xf32>
    %39 = vector.shape_cast %38 : vector<8xf32> to vector<8x1xf32>
    %40 = tpu.concatenate %36, %39 in 1 : vector<8x1xf32>, vector<8x1xf32> -> vector<8x2xf32>
    %c0_24 = arith.constant 0 : index
    %c0_25 = arith.constant 0 : index
    %c0_26 = arith.constant 0 : index
    %c0_27 = arith.constant 0 : index
    %41 = vector.load %arg6[%c0_24, %c0_25, %c0_26, %c0_27] : memref<1x1x8x2xf32, #tpu.memory_space<vmem>>, vector<1x1x8x2xf32>
    %42 = vector.shape_cast %41 : vector<1x1x8x2xf32> to vector<8x2xf32>
    %43 = vector.shape_cast %40 : vector<8x2xf32> to vector<1x1x8x2xf32>
    tpu.vector_store %arg6[%c0_24, %c0_25, %c0_26, %c0_27], %43 {strides = array<i32>} : memref<1x1x8x2xf32, #tpu.memory_space<vmem>>, vector<1x1x8x2xf32>,
    return
  }
  func.func @transform_0(%arg0: i32) -> (i32, i32, i32) {
    %c0_i32 = arith.constant 0 : i32
    %c0_i32_0 = arith.constant 0 : i32
    %c0_i32_1 = arith.constant 0 : i32
    return %arg0, %c0_i32, %c0_i32_0 : i32, i32, i32
  }
  func.func @transform_1(%arg0: i32) -> (i32, i32) {
    %c0_i32 = arith.constant 0 : i32
    %c0_i32_0 = arith.constant 0 : i32
    %c0_i32_1 = arith.constant 0 : i32
    return %c0_i32, %c0_i32_0 : i32, i32
  }
  func.func @transform_2(%arg0: i32) -> (i32, i32) {
    %c0_i32 = arith.constant 0 : i32
    %c0_i32_0 = arith.constant 0 : i32
    %c0_i32_1 = arith.constant 0 : i32
    return %c0_i32, %c0_i32_0 : i32, i32
  }
  func.func @transform_3(%arg0: i32) -> (i32, i32, i32) {
    %c0_i32 = arith.constant 0 : i32
    %c0_i32_0 = arith.constant 0 : i32
    %c0_i32_1 = arith.constant 0 : i32
    %c0_i32_2 = arith.constant 0 : i32
    return %c0_i32, %c0_i32_0, %c0_i32_1 : i32, i32, i32
  }
  func.func @transform_4(%arg0: i32) -> (i32, i32, i32) {
    %c0_i32 = arith.constant 0 : i32
    %c0_i32_0 = arith.constant 0 : i32
    %c0_i32_1 = arith.constant 0 : i32
    return %arg0, %c0_i32, %c0_i32_0 : i32, i32, i32
  }
  func.func @transform_5(%arg0: i32) -> (i32, i32, i32, i32) {
    %c0_i32 = arith.constant 0 : i32
    %c0_i32_0 = arith.constant 0 : i32
    %c0_i32_1 = arith.constant 0 : i32
    %c0_i32_2 = arith.constant 0 : i32
    return %arg0, %c0_i32, %c0_i32_0, %c0_i32_1 : i32, i32, i32, i32
  }
}

</mosaic_0001>

<llo_original>
// kernel: basic_block_1d.5
$region0: #{basic_block_1d.5}
  #allocation0 [shape = 'u32[]', space=smem, size = 0x4, offset = 0x4, fixed_abs, tag = 'smem constant byte address 0x4 - core index']
  #allocation1 [shape = 'u32[144,128]{1,0:T(1,128)}', space=vmem, size = 0x12000, scoped, tag = 'internal scratch']
  %s0 = inlined_call_operand.vmem [shape: f32[2,8,256], index: 0, kind: input, shape index: {}]
  %s1 = inlined_call_operand.vmem [shape: f32[2,8,256], index: 1, kind: input, shape index: {}]
  %s2 = inlined_call_operand.vmem [shape: f32[8,1], index: 2, kind: input, shape index: {}]
  %s3 = inlined_call_operand.vmem [shape: f32[8,1], index: 3, kind: input, shape index: {}]
  %s4 = inlined_call_operand.hbm [shape: f32[2,8,256], index: 4, kind: output, shape index: {}]
  %s5 = sld [smem:[#allocation0]]
  $region49: #{basic_block_1d.5} parent=0
    _
  %s7 = ssub.s32 1, %s5
  %s8 = scalar_select 0, %s7, %s5
  $region1: #{basic_block_1d.5} parent=0
    #allocation2 [shape = 'u8[16384]{0}', space=vmem, size = 0x4000, scoped, tag = 'output window, operand 0']
    #allocation3 [shape = 's32[2]{0}', space=sflag, size = 0x8, scoped, tag = 'scoped memory for basic_block_1d.5']
    %9 = vsyncpa [#allocation3], 0
    %s10 = scalar_lea.sflag [#allocation3], 1
    %11 = vsyncpa %s10, 0
    loop: start=0, step=1, limit=4
    $region2: #{basic_block_1d.5} parent=1 // loop_pre_header
      _
    $region3: #{basic_block_1d.5} parent=1 // loop_header
      %s13 = sphi 0, %s17
      %p14 = scmp.ge.s32.totalorder %s13, 4
      %s23 = sphi 0, %s25
      %s26 = sphi 0, %s23
      %s27 = sphi 0, %s26
      %s43 = sphi 0, %s27
      %s49 = sphi 0, %s51
      %s52 = sphi 0, %s49
      %s53 = sphi 0, %s52
      %s69 = sphi 0, %s53
      %s73 = sphi 0, %s73
      %s75 = sphi 0, %s73
      %s76 = sphi 0, %s75
      %s90 = sphi 0, %s76
      %s94 = sphi 0, %s94
      %s96 = sphi 0, %s94
      %s97 = sphi 0, %s96
      %s111 = sphi 0, %s97
      %s117 = sphi 0, %s119
      %s120 = sphi 0, %s117
      %s121 = sphi 0, %s120
      %s137 = sphi 0, %s121
    $region4: #{basic_block_1d.5} parent=1 // loop_header_branch
      %16 = sbr.rel (%p14) target = $region8
    $region5: #{basic_block_1d.5} parent=1 // loop_body
      %s18 = ssub.s32 %s13, 1
      %s19 = ssub.s32 %s13, 2
      %s20 = sadd.s32 %s13, 1
      %s21 = ssub.s32 %s13, %s20
      %p22 = scmp.eq.s32.totalorder %s21, 0
      %s24 = sadd.s32 %s23, 1
      %s25 = scalar_select %p22, %s23, %s24
      %p28 = pneg %p22
      %p29 = scmp.eq.s32.totalorder %s13, 1
      %p30 = por %p28, %p29
      %p31 = scmp.ne.s32.totalorder %s23, %s26
      %p32 = scmp.eq.s32.totalorder %s13, 0
      %p33 = por %p31, %p32
      %p34 = scmp.ne.s32.totalorder %s23, %s26
      %p35 = scmp.eq.s32.totalorder %s18, 1
      %p36 = por %p34, %p35
      %p37 = scmp.ne.s32.totalorder %s26, %s27
      %p38 = scmp.eq.s32.totalorder %s18, 0
      %p39 = por %p37, %p38
      %p40 = scmp.ne.s32.totalorder %s26, %s27
      %p41 = scmp.eq.s32.totalorder %s19, 1
      %p42 = por %p40, %p41
      %p44 = scmp.ne.s32.totalorder %s27, %s43
      %p45 = scmp.eq.s32.totalorder %s19, 0
      %p46 = por %p44, %p45
      %s47 = ssub.s32 %s13, %s20
      %p48 = scmp.eq.s32.totalorder %s47, 0
      %s50 = sadd.s32 %s49, 1
      %s51 = scalar_select %p48, %s49, %s50
      %p54 = pneg %p48
      %p55 = scmp.eq.s32.totalorder %s13, 1
      %p56 = por %p54, %p55
      %p57 = scmp.ne.s32.totalorder %s49, %s52
      %p58 = scmp.eq.s32.totalorder %s13, 0
      %p59 = por %p57, %p58
      %p60 = scmp.ne.s32.totalorder %s49, %s52
      %p61 = scmp.eq.s32.totalorder %s18, 1
      %p62 = por %p60, %p61
      %p63 = scmp.ne.s32.totalorder %s52, %s53
      %p64 = scmp.eq.s32.totalorder %s18, 0
      %p65 = por %p63, %p64
      %p66 = scmp.ne.s32.totalorder %s52, %s53
      %p67 = scmp.eq.s32.totalorder %s19, 1
      %p68 = por %p66, %p67
      %p70 = scmp.ne.s32.totalorder %s53, %s69
      %p71 = scmp.eq.s32.totalorder %s19, 0
      %p72 = por %p70, %p71
      %s74 = sadd.s32 %s73, 1
      %p77 = scmp.eq.s32.totalorder %s13, 1
      %p78 = scmp.ne.s32.totalorder %s73, %s75
      %p79 = scmp.eq.s32.totalorder %s13, 0
      %p80 = por %p78, %p79
      %p81 = scmp.ne.s32.totalorder %s73, %s75
      %p82 = scmp.eq.s32.totalorder %s18, 1
      %p83 = por %p81, %p82
      %p84 = scmp.ne.s32.totalorder %s75, %s76
      %p85 = scmp.eq.s32.totalorder %s18, 0
      %p86 = por %p84, %p85
      %p87 = scmp.ne.s32.totalorder %s75, %s76
      %p88 = scmp.eq.s32.totalorder %s19, 1
      %p89 = por %p87, %p88
      %p91 = scmp.ne.s32.totalorder %s76, %s90
      %p92 = scmp.eq.s32.totalorder %s19, 0
      %p93 = por %p91, %p92
      %s95 = sadd.s32 %s94, 1
      %p98 = scmp.eq.s32.totalorder %s13, 1
      %p99 = scmp.ne.s32.totalorder %s94, %s96
      %p100 = scmp.eq.s32.totalorder %s13, 0
      %p101 = por %p99, %p100
      %p102 = scmp.ne.s32.totalorder %s94, %s96
      %p103 = scmp.eq.s32.totalorder %s18, 1
      %p104 = por %p102, %p103
      %p105 = scmp.ne.s32.totalorder %s96, %s97
      %p106 = scmp.eq.s32.totalorder %s18, 0
      %p107 = por %p105, %p106
      %p108 = scmp.ne.s32.totalorder %s96, %s97
      %p109 = scmp.eq.s32.totalorder %s19, 1
      %p110 = por %p108, %p109
      %p112 = scmp.ne.s32.totalorder %s97, %s111
      %p113 = scmp.eq.s32.totalorder %s19, 0
      %p114 = por %p112, %p113
      %s115 = ssub.s32 %s13, %s20
      %p116 = scmp.eq.s32.totalorder %s115, 0
      %s118 = sadd.s32 %s117, 1
      %s119 = scalar_select %p116, %s117, %s118
      %p122 = pneg %p116
      %p123 = scmp.eq.s32.totalorder %s13, 1
      %p124 = por %p122, %p123
      %p125 = scmp.ne.s32.totalorder %s117, %s120
      %p126 = scmp.eq.s32.totalorder %s13, 0
      %p127 = por %p125, %p126
      %p128 = scmp.ne.s32.totalorder %s117, %s120
      %p129 = scmp.eq.s32.totalorder %s18, 1
      %p130 = por %p128, %p129
      %p131 = scmp.ne.s32.totalorder %s120, %s121
      %p132 = scmp.eq.s32.totalorder %s18, 0
      %p133 = por %p131, %p132
      %p134 = scmp.ne.s32.totalorder %s120, %s121
      %p135 = scmp.eq.s32.totalorder %s19, 1
      %p136 = por %p134, %p135
      %p138 = scmp.ne.s32.totalorder %s121, %s137
      %p139 = scmp.eq.s32.totalorder %s19, 0
      %p140 = por %p138, %p139
      %p141 = scmp.le.s32.totalorder 1, %s13
      %p142 = scmp.lt.s32.totalorder %s13, 3
      %p143 = pnand %p141, %p142
      %p144 = pneg %p143
      // Predicated region
      $region9: #{basic_block_1d.5} parent=5 // pred_check
        _
      $region10: #{basic_block_1d.5} parent=5 // pred_check_branch
        %146 = sbr.rel (%p143) target = $region12
      $region11: #{basic_block_1d.5} parent=5 // pred_region
        %s147 = ssub.s32 %s13, 1
        // Predicated region
        $region13: #{basic_block_1d.5} parent=11 // pred_check
          %p148 = pneg %p86
        $region14: #{basic_block_1d.5} parent=11 // pred_check_branch
          %150 = sbr.rel (%p148) target = $region16
        $region15: #{basic_block_1d.5} parent=11 // pred_region
          _
        $region16: #{basic_block_1d.5} parent=11 // pred_fallthru
          _
        // Predicated region
        $region17: #{basic_block_1d.5} parent=11 // pred_check
          %p151 = pneg %p107
        $region18: #{basic_block_1d.5} parent=11 // pred_check_branch
          %153 = sbr.rel (%p151) target = $region20
        $region19: #{basic_block_1d.5} parent=11 // pred_region
          _
        $region20: #{basic_block_1d.5} parent=11 // pred_fallthru
          _
      $region12: #{basic_block_1d.5} parent=5 // pred_fallthru
        _
      %p154 = scmp.lt.s32.totalorder %s13, 2
      // Predicated region
      $region21: #{basic_block_1d.5} parent=5 // pred_check
        %p155 = pneg %p154
      $region22: #{basic_block_1d.5} parent=5 // pred_check_branch
        %157 = sbr.rel (%p155) target = $region24
      $region23: #{basic_block_1d.5} parent=5 // pred_region
        // Predicated region
        $region25: #{basic_block_1d.5} parent=23 // pred_check
          %p158 = pneg %p33
        $region26: #{basic_block_1d.5} parent=23 // pred_check_branch
          %160 = sbr.rel (%p158) target = $region28
        $region27: #{basic_block_1d.5} parent=23 // pred_region
          %p161 = scmp.lt.s32.totalorder %s13, 1
          %s162 = scalar_select %p161, %s13, 1
          %s163 = smul.addr %s162, 2
          %s164 = smul.addr %s163, 8
          %s165 = scalar_lea.vmem %s0, %s164
        $region28: #{basic_block_1d.5} parent=23 // pred_fallthru
          _
        // Predicated region
        $region29: #{basic_block_1d.5} parent=23 // pred_check
          %p166 = pneg %p59
        $region30: #{basic_block_1d.5} parent=23 // pred_check_branch
          %168 = sbr.rel (%p166) target = $region32
        $region31: #{basic_block_1d.5} parent=23 // pred_region
          %p169 = scmp.lt.s32.totalorder %s13, 1
          %s170 = scalar_select %p169, %s13, 1
          %s171 = smul.addr %s170, 2
          %s172 = smul.addr %s171, 8
          %s173 = scalar_lea.vmem %s1, %s172
        $region32: #{basic_block_1d.5} parent=23 // pred_fallthru
          _
      $region24: #{basic_block_1d.5} parent=5 // pred_fallthru
        _
      %p174 = scmp.le.s32.totalorder 1, %s13
      %p175 = scmp.lt.s32.totalorder %s13, 3
      %p176 = pnand %p174, %p175
      %p177 = pneg %p176
      // Predicated region
      $region33: #{basic_block_1d.5} parent=5 // pred_check
        _
      $region34: #{basic_block_1d.5} parent=5 // pred_check_branch
        %179 = sbr.rel (%p176) target = $region36
      $region35: #{basic_block_1d.5} parent=5 // pred_region
        %s180 = ssub.s32 %s13, 1
        %p181 = scmp.lt.s32.totalorder %s18, 1
        %s182 = scalar_select %p181, %s18, 1
        %s183 = smul.addr %s182, 2
        %s184 = smul.addr %s183, 8
        %s185 = scalar_lea.vmem %s0, %s184
        %p186 = pneg %p39
        %p187 = pneg %p36
        %p188 = scmp.lt.s32.totalorder %s18, 1
        %s189 = scalar_select %p188, %s18, 1
        %s190 = smul.addr %s189, 2
        %s191 = smul.addr %s190, 8
        %s192 = scalar_lea.vmem %s1, %s191
        %p193 = pneg %p65
        %p194 = pneg %p62
        %p195 = pneg %p86
        %p196 = pneg %p83
        %p197 = pneg %p107
        %p198 = pneg %p104
        %p199 = pneg %p133
        %p200 = pneg %p130
        %s201 = sand.u32 %s120, 1
        %s202 = scalar_lea.sflag [#allocation3], %s201
        %s203 = sand.u32 %s120, 1
        %s204 = smul.addr %s203, 16
        %s205 = scalar_lea.vmem [#allocation2], %s204
        %p206 = scmp.lt.s32.totalorder %s18, 1
        %s207 = scalar_select %p206, %s18, 1
        %s208 = smul.addr %s207, 2
        %s209 = smul.addr %s208, 8
        %s210 = scalar_lea.vmem %s0, %s209
        %p211 = scmp.lt.s32.totalorder %s18, 1
        %s212 = scalar_select %p211, %s18, 1
        %s213 = smul.addr %s212, 2
        %s214 = smul.addr %s213, 8
        %s215 = scalar_lea.vmem %s1, %s214
        %v216 = vld [vmem:[%s210] sm:$0xff]
        %v217 = vld [vmem:[%s210 + $0x8] sm:$0xff]
        %v218 = vld [vmem:[%s215] sm:$0xff]
        %v219 = vld [vmem:[%s215 + $0x8] sm:$0xff]
        %v220 = vld [vmem:[%s2] sm:$0xff]
        %222 = vset.pattern.permute.xlu0 0
        %223 = vperm.xlu0 %222, %v220
        %v224 = vpop.permute.xlu0 %223
        %v226 = vmul.f32 %v216, %v224
        %v227 = vmul.f32 %v217, %v224
        %v228 = vld [vmem:[%s3] sm:$0xff]
        %230 = vset.pattern.permute.xlu0 0
        %231 = vperm.xlu0 %230, %v228
        %v232 = vpop.permute.xlu0 %231
        %v234 = vadd.f32 %v226, %v232
        %v235 = vadd.f32 %v227, %v232
        %v236 = vadd.f32 %v234, %v218
        %v237 = vadd.f32 %v235, %v219
        %v238 = vmax.f32 %v236, 0.0
        %v239 = vmax.f32 %v237, 0.0
        %240 = vst [vmem:[%s205] sm:$0xff] %v238
        %241 = vst [vmem:[%s205 + $0x8] sm:$0xff] %v239
        %s242 = sand.u32 %s120, 1
        %s243 = scalar_lea.sflag [#allocation3], %s242
        %s244 = sand.u32 %s120, 1
        %s245 = smul.addr %s244, 16
        %s246 = scalar_lea.vmem [#allocation2], %s245
        // Predicated region
        $region37: #{basic_block_1d.5} parent=35 // pred_check
          %p247 = pneg %p130
        $region38: #{basic_block_1d.5} parent=35 // pred_check_branch
          %249 = sbr.rel (%p247) target = $region40
        $region39: #{basic_block_1d.5} parent=35 // pred_region
          %s251 = ssub.s32 256, 256
          %252 = vsyncadd %s243, %s251
          %s253 = smul.addr %s18, 2
          %s254 = smul.addr %s253, 128
          %s255 = scalar_lea.hbm %s4, %s254
          %s257 = sshll.u32 %s246, 4
          %s258 = int_to_ptr.vmem [resolvable:$true] %s257
          %260 = dma.vmem_to_hbm [thread:$0]  %s258, 256, %s255, %s243
        $region40: #{basic_block_1d.5} parent=35 // pred_fallthru
          _
      $region36: #{basic_block_1d.5} parent=5 // pred_fallthru
        _
      %p261 = scmp.le.s32.totalorder 2, %s13
      // Predicated region
      $region41: #{basic_block_1d.5} parent=5 // pred_check
        %p262 = pneg %p261
      $region42: #{basic_block_1d.5} parent=5 // pred_check_branch
        %264 = sbr.rel (%p262) target = $region44
      $region43: #{basic_block_1d.5} parent=5 // pred_region
        %s265 = ssub.s32 %s13, 2
        // Predicated region
        $region45: #{basic_block_1d.5} parent=43 // pred_check
          %p266 = pneg %p136
        $region46: #{basic_block_1d.5} parent=43 // pred_check_branch
          %268 = sbr.rel (%p266) target = $region48
        $region47: #{basic_block_1d.5} parent=43 // pred_region
          %s269 = sand.u32 %s121, 1
          %s270 = scalar_lea.sflag [#allocation3], %s269
          %s271 = sand.u32 %s121, 1
          %s272 = smul.addr %s271, 16
          %s273 = scalar_lea.vmem [#allocation2], %s272
          %274 = dma.done %s270, 256
        $region48: #{basic_block_1d.5} parent=43 // pred_fallthru
          _
      $region44: #{basic_block_1d.5} parent=5 // pred_fallthru
        _
    $region6: #{basic_block_1d.5} parent=1 // loop_footer
      %s17 = sadd.s32 1, %s13
    $region7: #{basic_block_1d.5} parent=1 // loop_footer_branch
      %12 = sbr.rel target = $region3
    $region8: #{basic_block_1d.5} parent=1 // loop_exit
      _
    %275 = vsyncpa [#allocation3], 1
    %s276 = scalar_lea.sflag [#allocation3], 1
    %277 = vsyncpa %s276, 1

// kernel: basic_block_1d.3
$region0: #{basic_block_1d.3}
  #allocation0 [shape = 'u32[]', space=smem, size = 0x4, offset = 0x4, fixed_abs, tag = 'smem constant byte address 0x4 - core index']
  #allocation1 [shape = 'u32[144,128]{1,0:T(1,128)}', space=vmem, size = 0x12000, scoped, tag = 'internal scratch']
  %s0 = inlined_call_operand.hbm [shape: f32[2,8,256], index: 0, kind: input, shape index: {}]
  %s1 = inlined_call_operand.hbm [shape: f32[3,8,8], index: 1, kind: input, shape index: {}]
  %s2 = inlined_call_operand.vmem [shape: f32[2,8,256], index: 2, kind: output, shape index: {0}]
  %s3 = inlined_call_operand.vmem [shape: f32[2,1,8,2], index: 3, kind: output, shape index: {1}]
  %4 = xla_tuple %s2, %s3
  %s5 = sld [smem:[#allocation0]]
  $region57: #{basic_block_1d.3} parent=0
    _
  %s7 = ssub.s32 1, %s5
  %s8 = scalar_select 0, %s7, %s5
  $region1: #{basic_block_1d.3} parent=0
    #allocation2 [shape = 'u8[16384]{0}', space=vmem, size = 0x4000, scoped, tag = 'input window, operand 0']
    #allocation3 [shape = 's32[2]{0}', space=sflag, size = 0x8, scoped, tag = 'scoped memory for basic_block_1d.3']
    #allocation4 [shape = 'u8[12288]{0}', space=vmem, size = 0x3000, scoped, tag = 'input window, operand 1, single buffered']
    #allocation5 [shape = 's32[1]{0}', space=sflag, size = 0x4, scoped, tag = 'scoped memory for basic_block_1d.3']
    %9 = vsyncpa [#allocation3], 0
    %s10 = scalar_lea.sflag [#allocation3], 1
    %11 = vsyncpa %s10, 0
    %12 = vsyncpa [#allocation5], 0
    loop: start=0, step=1, limit=4
    $region2: #{basic_block_1d.3} parent=1 // loop_pre_header
      _
    $region3: #{basic_block_1d.3} parent=1 // loop_header
      %s14 = sphi 0, %s18
      %p15 = scmp.ge.s32.totalorder %s14, 4
      %s24 = sphi 0, %s26
      %s27 = sphi 0, %s24
      %s28 = sphi 0, %s27
      %s44 = sphi 0, %s28
      %s48 = sphi 0, %s48
      %s50 = sphi 0, %s48
      %s51 = sphi 0, %s50
      %s65 = sphi 0, %s51
      %s71 = sphi 0, %s73
      %s74 = sphi 0, %s71
      %s75 = sphi 0, %s74
      %s91 = sphi 0, %s75
      %s97 = sphi 0, %s99
      %s100 = sphi 0, %s97
      %s101 = sphi 0, %s100
      %s117 = sphi 0, %s101
    $region4: #{basic_block_1d.3} parent=1 // loop_header_branch
      %17 = sbr.rel (%p15) target = $region8
    $region5: #{basic_block_1d.3} parent=1 // loop_body
      %s19 = ssub.s32 %s14, 1
      %s20 = ssub.s32 %s14, 2
      %s21 = sadd.s32 %s14, 1
      %s22 = ssub.s32 %s14, %s21
      %p23 = scmp.eq.s32.totalorder %s22, 0
      %s25 = sadd.s32 %s24, 1
      %s26 = scalar_select %p23, %s24, %s25
      %p29 = pneg %p23
      %p30 = scmp.eq.s32.totalorder %s14, 1
      %p31 = por %p29, %p30
      %p32 = scmp.ne.s32.totalorder %s24, %s27
      %p33 = scmp.eq.s32.totalorder %s14, 0
      %p34 = por %p32, %p33
      %p35 = scmp.ne.s32.totalorder %s24, %s27
      %p36 = scmp.eq.s32.totalorder %s19, 1
      %p37 = por %p35, %p36
      %p38 = scmp.ne.s32.totalorder %s27, %s28
      %p39 = scmp.eq.s32.totalorder %s19, 0
      %p40 = por %p38, %p39
      %p41 = scmp.ne.s32.totalorder %s27, %s28
      %p42 = scmp.eq.s32.totalorder %s20, 1
      %p43 = por %p41, %p42
      %p45 = scmp.ne.s32.totalorder %s28, %s44
      %p46 = scmp.eq.s32.totalorder %s20, 0
      %p47 = por %p45, %p46
      %s49 = sadd.s32 %s48, 1
      %p52 = scmp.eq.s32.totalorder %s14, 1
      %p53 = scmp.ne.s32.totalorder %s48, %s50
      %p54 = scmp.eq.s32.totalorder %s14, 0
      %p55 = por %p53, %p54
      %p56 = scmp.ne.s32.totalorder %s48, %s50
      %p57 = scmp.eq.s32.totalorder %s19, 1
      %p58 = por %p56, %p57
      %p59 = scmp.ne.s32.totalorder %s50, %s51
      %p60 = scmp.eq.s32.totalorder %s19, 0
      %p61 = por %p59, %p60
      %p62 = scmp.ne.s32.totalorder %s50, %s51
      %p63 = scmp.eq.s32.totalorder %s20, 1
      %p64 = por %p62, %p63
      %p66 = scmp.ne.s32.totalorder %s51, %s65
      %p67 = scmp.eq.s32.totalorder %s20, 0
      %p68 = por %p66, %p67
      %s69 = ssub.s32 %s14, %s21
      %p70 = scmp.eq.s32.totalorder %s69, 0
      %s72 = sadd.s32 %s71, 1
      %s73 = scalar_select %p70, %s71, %s72
      %p76 = pneg %p70
      %p77 = scmp.eq.s32.totalorder %s14, 1
      %p78 = por %p76, %p77
      %p79 = scmp.ne.s32.totalorder %s71, %s74
      %p80 = scmp.eq.s32.totalorder %s14, 0
      %p81 = por %p79, %p80
      %p82 = scmp.ne.s32.totalorder %s71, %s74
      %p83 = scmp.eq.s32.totalorder %s19, 1
      %p84 = por %p82, %p83
      %p85 = scmp.ne.s32.totalorder %s74, %s75
      %p86 = scmp.eq.s32.totalorder %s19, 0
      %p87 = por %p85, %p86
      %p88 = scmp.ne.s32.totalorder %s74, %s75
      %p89 = scmp.eq.s32.totalorder %s20, 1
      %p90 = por %p88, %p89
      %p92 = scmp.ne.s32.totalorder %s75, %s91
      %p93 = scmp.eq.s32.totalorder %s20, 0
      %p94 = por %p92, %p93
      %s95 = ssub.s32 %s14, %s21
      %p96 = scmp.eq.s32.totalorder %s95, 0
      %s98 = sadd.s32 %s97, 1
      %s99 = scalar_select %p96, %s97, %s98
      %p102 = pneg %p96
      %p103 = scmp.eq.s32.totalorder %s14, 1
      %p104 = por %p102, %p103
      %p105 = scmp.ne.s32.totalorder %s97, %s100
      %p106 = scmp.eq.s32.totalorder %s14, 0
      %p107 = por %p105, %p106
      %p108 = scmp.ne.s32.totalorder %s97, %s100
      %p109 = scmp.eq.s32.totalorder %s19, 1
      %p110 = por %p108, %p109
      %p111 = scmp.ne.s32.totalorder %s100, %s101
      %p112 = scmp.eq.s32.totalorder %s19, 0
      %p113 = por %p111, %p112
      %p114 = scmp.ne.s32.totalorder %s100, %s101
      %p115 = scmp.eq.s32.totalorder %s20, 1
      %p116 = por %p114, %p115
      %p118 = scmp.ne.s32.totalorder %s101, %s117
      %p119 = scmp.eq.s32.totalorder %s20, 0
      %p120 = por %p118, %p119
      %p121 = scmp.le.s32.totalorder 1, %s14
      %p122 = scmp.lt.s32.totalorder %s14, 3
      %p123 = pnand %p121, %p122
      %p124 = pneg %p123
      // Predicated region
      $region9: #{basic_block_1d.3} parent=5 // pred_check
        _
      $region10: #{basic_block_1d.3} parent=5 // pred_check_branch
        %126 = sbr.rel (%p123) target = $region12
      $region11: #{basic_block_1d.3} parent=5 // pred_region
        %s127 = ssub.s32 %s14, 1
        // Predicated region
        $region13: #{basic_block_1d.3} parent=11 // pred_check
          %p128 = pneg %p61
        $region14: #{basic_block_1d.3} parent=11 // pred_check_branch
          %130 = sbr.rel (%p128) target = $region16
        $region15: #{basic_block_1d.3} parent=11 // pred_region
          %s132 = ssub.s32 384, 384
          %133 = vsyncadd [#allocation5], %s132
          %s134 = sshll.u32 [#allocation4], 4
          %s135 = int_to_ptr.vmem [resolvable:$true] %s134
          %140 = dma.hbm_to_vmem [thread:$0]  %s1, 384, %s135, [#allocation5], 128, 128, 8
        $region16: #{basic_block_1d.3} parent=11 // pred_fallthru
          _
      $region12: #{basic_block_1d.3} parent=5 // pred_fallthru
        _
      %p141 = scmp.lt.s32.totalorder %s14, 2
      // Predicated region
      $region17: #{basic_block_1d.3} parent=5 // pred_check
        %p142 = pneg %p141
      $region18: #{basic_block_1d.3} parent=5 // pred_check_branch
        %144 = sbr.rel (%p142) target = $region20
      $region19: #{basic_block_1d.3} parent=5 // pred_region
        // Predicated region
        $region21: #{basic_block_1d.3} parent=19 // pred_check
          %p145 = pneg %p34
        $region22: #{basic_block_1d.3} parent=19 // pred_check_branch
          %147 = sbr.rel (%p145) target = $region24
        $region23: #{basic_block_1d.3} parent=19 // pred_region
          %s148 = sand.u32 %s24, 1
          %s149 = scalar_lea.sflag [#allocation3], %s148
          %s150 = sand.u32 %s24, 1
          %s151 = smul.addr %s150, 16
          %s152 = scalar_lea.vmem [#allocation2], %s151
          %s154 = ssub.s32 256, 256
          %155 = vsyncadd %s149, %s154
          %s156 = smul.addr %s14, 2
          %s157 = smul.addr %s156, 128
          %s158 = scalar_lea.hbm %s0, %s157
          %s160 = sshll.u32 %s152, 4
          %s161 = int_to_ptr.vmem [resolvable:$true] %s160
          %163 = dma.hbm_to_vmem [thread:$0]  %s158, 256, %s161, %s149
        $region24: #{basic_block_1d.3} parent=19 // pred_fallthru
          _
      $region20: #{basic_block_1d.3} parent=5 // pred_fallthru
        _
      %p164 = scmp.le.s32.totalorder 1, %s14
      %p165 = scmp.lt.s32.totalorder %s14, 3
      %p166 = pnand %p164, %p165
      %p167 = pneg %p166
      // Predicated region
      $region25: #{basic_block_1d.3} parent=5 // pred_check
        _
      $region26: #{basic_block_1d.3} parent=5 // pred_check_branch
        %169 = sbr.rel (%p166) target = $region28
      $region27: #{basic_block_1d.3} parent=5 // pred_region
        %s170 = ssub.s32 %s14, 1
        %s171 = sand.u32 %s27, 1
        %s172 = scalar_lea.sflag [#allocation3], %s171
        %s173 = sand.u32 %s27, 1
        %s174 = smul.addr %s173, 16
        %s175 = scalar_lea.vmem [#allocation2], %s174
        // Predicated region
        $region29: #{basic_block_1d.3} parent=27 // pred_check
          %p176 = pneg %p40
        $region30: #{basic_block_1d.3} parent=27 // pred_check_branch
          %178 = sbr.rel (%p176) target = $region32
        $region31: #{basic_block_1d.3} parent=27 // pred_region
          %179 = dma.done %s172, 256
        $region32: #{basic_block_1d.3} parent=27 // pred_fallthru
          _
        // Predicated region
        $region33: #{basic_block_1d.3} parent=27 // pred_check
          %p180 = pneg %p61
        $region34: #{basic_block_1d.3} parent=27 // pred_check_branch
          %182 = sbr.rel (%p180) target = $region36
        $region35: #{basic_block_1d.3} parent=27 // pred_region
          %183 = dma.done [#allocation5], 384
        $region36: #{basic_block_1d.3} parent=27 // pred_fallthru
          _
        %s184 = sand.u32 %s27, 1
        %s185 = scalar_lea.sflag [#allocation3], %s184
        %s186 = sand.u32 %s27, 1
        %s187 = smul.addr %s186, 16
        %s188 = scalar_lea.vmem [#allocation2], %s187
        %p189 = pneg %p40
        %p190 = pneg %p37
        %p191 = pneg %p61
        %p192 = pneg %p58
        %p193 = pneg %p87
        %p194 = pneg %p84
        %p195 = scmp.lt.s32.totalorder %s19, 1
        %s196 = scalar_select %p195, %s19, 1
        %s197 = smul.addr %s196, 2
        %s198 = smul.addr %s197, 8
        %s199 = scalar_lea.vmem %s2, %s198
        %p200 = pneg %p113
        %p201 = pneg %p110
        %p202 = scmp.lt.s32.totalorder %s19, 1
        %s203 = scalar_select %p202, %s19, 1
        %s204 = smul.addr %s203, 8
        %s205 = scalar_lea.vmem %s3, %s204
        %p206 = scmp.lt.s32.totalorder %s19, 1
        %s207 = scalar_select %p206, %s19, 1
        %s208 = smul.addr %s207, 2
        %s209 = smul.addr %s208, 8
        %s210 = scalar_lea.vmem %s2, %s209
        %p211 = scmp.lt.s32.totalorder %s19, 1
        %s212 = scalar_select %p211, %s19, 1
        %s213 = smul.addr %s212, 8
        %s214 = scalar_lea.vmem %s3, %s213
        %v215 = vld [vmem:[%s175] sm:$0xff]
        %v216 = vld [vmem:[%s175 + $0x8] sm:$0xff]
        %v217 = vld [vmem:[#allocation4] sm:$0xff]
        %vm218 = vcmask 64512
        %v220 = vsel %vm218, %v217, 0
        %222 = vmatprep.subr.mxu0 %v216
        %223 = vmatpush1.msra.mxu0 %v215
        %224 = vmatprep.subr.mxu0 0.0
        %225 = vmatpush1.msra.mxu0 0.0
        %226 = vmatprep.subr.mxu0 0.0
        %227 = vmatpush1.msra.mxu0 0.0
        %228 = vmatprep.subr.mxu0 0.0
        %229 = vmatpush1.msra.mxu0 0.0
        %230 = vmatprep.subr.mxu0 0.0
        %231 = vmatpush1.msra.mxu0 0.0
        %232 = vmatprep.subr.mxu0 0.0
        %233 = vmatpush1.msra.mxu0 0.0
        %234 = vmatprep.subr.mxu0 0.0
        %235 = vmatpush1.msra.mxu0 0.0
        %236 = vmatprep.subr.mxu0 0.0
        %237 = vmatpush1.msra.mxu0 0.0
        %238 = vmatprep.subr.mxu0 0.0
        %239 = vmatpush1.msra.mxu0 0.0
        %240 = vmatprep.subr.mxu0 0.0
        %241 = vmatpush1.msra.mxu0 0.0
        %242 = vmatprep.subr.mxu0 0.0
        %243 = vmatpush1.msra.mxu0 0.0
        %244 = vmatprep.subr.mxu0 0.0
        %245 = vmatpush1.msra.mxu0 0.0
        %246 = vmatprep.subr.mxu0 0.0
        %247 = vmatpush1.msra.mxu0 0.0
        %248 = vmatprep.subr.mxu0 0.0
        %249 = vmatpush1.msra.mxu0 0.0
        %250 = vmatprep.subr.mxu0 0.0
        %251 = vmatpush1.msra.mxu0 0.0
        %252 = vmatprep.subr.mxu0 0.0
        %253 = vmatpush1.msra.mxu0 0.0
        %254 = vmatprep.subr.mxu0 0.0
        %255 = vmatpush1.msra.mxu0 0.0
        %256 = vmatprep.subr.mxu0 0.0
        %257 = vmatpush1.msra.mxu0 0.0
        %258 = vmatprep.subr.mxu0 0.0
        %259 = vmatpush1.msra.mxu0 0.0
        %260 = vmatprep.subr.mxu0 0.0
        %261 = vmatpush1.msra.mxu0 0.0
        %262 = vmatprep.subr.mxu0 0.0
        %263 = vmatpush1.msra.mxu0 0.0
        %264 = vmatprep.subr.mxu0 0.0
        %265 = vmatpush1.msra.mxu0 0.0
        %266 = vmatprep.subr.mxu0 0.0
        %267 = vmatpush1.msra.mxu0 0.0
        %268 = vmatprep.subr.mxu0 0.0
        %269 = vmatpush1.msra.mxu0 0.0
        %270 = vmatprep.subr.mxu0 0.0
        %271 = vmatpush1.msra.mxu0 0.0
        %272 = vmatprep.subr.mxu0 0.0
        %273 = vmatpush1.msra.mxu0 0.0
        %274 = vmatprep.subr.mxu0 0.0
        %275 = vmatpush1.msra.mxu0 0.0
        %276 = vmatprep.subr.mxu0 0.0
        %277 = vmatpush1.msra.mxu0 0.0
        %278 = vmatprep.subr.mxu0 0.0
        %279 = vmatpush1.msra.mxu0 0.0
        %280 = vmatprep.subr.mxu0 0.0
        %281 = vmatpush1.msra.mxu0 0.0
        %282 = vmatprep.subr.mxu0 0.0
        %283 = vmatpush1.msra.mxu0 0.0
        %284 = vmatprep.subr.mxu0 0.0
        %285 = vmatpush1.msra.mxu0 0.0
        %286 = vmatprep.mubr.f32.mxu0 0.0
        %287 = vmatmul.mubr.f32.gmra.mrb[0].mxu0 %v220
        %v288 = vpop.f32.mrb[0].mxu0
        %v289 = vadd.f32 0.0, %v288
        %v290 = vpop.f32.mrb[0].mxu0
        %v291 = vadd.f32 0.0, %v290
        %292 = vdwg.mxu0
        %s293 = scalar_lea.vmem [#allocation4], 8
        %v294 = vld [vmem:[%s293] sm:$0xff]
        %s295 = scalar_lea.vmem [#allocation4], 16
        %v296 = vld [vmem:[%s295] sm:$0xff]
        %v298 = vsel %vm218, %v296, 0
        %300 = vmatprep.subr.mxu0 %v216
        %301 = vmatpush1.msra.mxu0 %v215
        %302 = vmatprep.subr.mxu0 0.0
        %303 = vmatpush1.msra.mxu0 0.0
        %304 = vmatprep.subr.mxu0 0.0
        %305 = vmatpush1.msra.mxu0 0.0
        %306 = vmatprep.subr.mxu0 0.0
        %307 = vmatpush1.msra.mxu0 0.0
        %308 = vmatprep.subr.mxu0 0.0
        %309 = vmatpush1.msra.mxu0 0.0
        %310 = vmatprep.subr.mxu0 0.0
        %311 = vmatpush1.msra.mxu0 0.0
        %312 = vmatprep.subr.mxu0 0.0
        %313 = vmatpush1.msra.mxu0 0.0
        %314 = vmatprep.subr.mxu0 0.0
        %315 = vmatpush1.msra.mxu0 0.0
        %316 = vmatprep.subr.mxu0 0.0
        %317 = vmatpush1.msra.mxu0 0.0
        %318 = vmatprep.subr.mxu0 0.0
        %319 = vmatpush1.msra.mxu0 0.0
        %320 = vmatprep.subr.mxu0 0.0
        %321 = vmatpush1.msra.mxu0 0.0
        %322 = vmatprep.subr.mxu0 0.0
        %323 = vmatpush1.msra.mxu0 0.0
        %324 = vmatprep.subr.mxu0 0.0
        %325 = vmatpush1.msra.mxu0 0.0
        %326 = vmatprep.subr.mxu0 0.0
        %327 = vmatpush1.msra.mxu0 0.0
        %328 = vmatprep.subr.mxu0 0.0
        %329 = vmatpush1.msra.mxu0 0.0
        %330 = vmatprep.subr.mxu0 0.0
        %331 = vmatpush1.msra.mxu0 0.0
        %332 = vmatprep.subr.mxu0 0.0
        %333 = vmatpush1.msra.mxu0 0.0
        %334 = vmatprep.subr.mxu0 0.0
        %335 = vmatpush1.msra.mxu0 0.0
        %336 = vmatprep.subr.mxu0 0.0
        %337 = vmatpush1.msra.mxu0 0.0
        %338 = vmatprep.subr.mxu0 0.0
        %339 = vmatpush1.msra.mxu0 0.0
        %340 = vmatprep.subr.mxu0 0.0
        %341 = vmatpush1.msra.mxu0 0.0
        %342 = vmatprep.subr.mxu0 0.0
        %343 = vmatpush1.msra.mxu0 0.0
        %344 = vmatprep.subr.mxu0 0.0
        %345 = vmatpush1.msra.mxu0 0.0
        %346 = vmatprep.subr.mxu0 0.0
        %347 = vmatpush1.msra.mxu0 0.0
        %348 = vmatprep.subr.mxu0 0.0
        %349 = vmatpush1.msra.mxu0 0.0
        %350 = vmatprep.subr.mxu0 0.0
        %351 = vmatpush1.msra.mxu0 0.0
        %352 = vmatprep.subr.mxu0 0.0
        %353 = vmatpush1.msra.mxu0 0.0
        %354 = vmatprep.subr.mxu0 0.0
        %355 = vmatpush1.msra.mxu0 0.0
        %356 = vmatprep.subr.mxu0 0.0
        %357 = vmatpush1.msra.mxu0 0.0
        %358 = vmatprep.subr.mxu0 0.0
        %359 = vmatpush1.msra.mxu0 0.0
        %360 = vmatprep.subr.mxu0 0.0
        %361 = vmatpush1.msra.mxu0 0.0
        %362 = vmatprep.subr.mxu0 0.0
        %363 = vmatpush1.msra.mxu0 0.0
        %364 = vmatprep.mubr.f32.mxu0 0.0
        %365 = vmatmul.mubr.f32.gmra.mrb[0].mxu0 %v298
        %v366 = vpop.f32.mrb[0].mxu0
        %v367 = vadd.f32 0.0, %v366
        %v368 = vpop.f32.mrb[0].mxu0
        %v369 = vadd.f32 0.0, %v368
        %370 = vdwg.mxu0
        %v371 = vlaneseq
        %v372 = vand.u32 %v371, 127
        %v373 = vadd.s32 %v372, 128
        %vm374 = vcmp.eq.s32.totalorder %v372, 0
        %vm375 = vcmp.eq.s32.totalorder %v373, 0
        %376 = vrot.lane.b32.xlu0 %v289, 1
        %v377 = vpop.permute.xlu0 %376
        %378 = vrot.lane.b32.xlu0 %v291, 1
        %v379 = vpop.permute.xlu0 %378
        %vm380 = vcmp.lt.s32.totalorder %v372, 1
        %v381 = vsel %vm380, %v377, %v379
        %v382 = vsel %vm380, %v379, %v377
        %v383 = vsel %vm374, 0.0, %v382
        %v384 = vsel %vm375, 0.0, %v381
        %v386 = vsel %vm218, %v294, 0
        %388 = vmatprep.subr.mxu0 %v216
        %389 = vmatpush1.msra.mxu0 %v215
        %390 = vmatprep.subr.mxu0 0.0
        %391 = vmatpush1.msra.mxu0 0.0
        %392 = vmatprep.subr.mxu0 0.0
        %393 = vmatpush1.msra.mxu0 0.0
        %394 = vmatprep.subr.mxu0 0.0
        %395 = vmatpush1.msra.mxu0 0.0
        %396 = vmatprep.subr.mxu0 0.0
        %397 = vmatpush1.msra.mxu0 0.0
        %398 = vmatprep.subr.mxu0 0.0
        %399 = vmatpush1.msra.mxu0 0.0
        %400 = vmatprep.subr.mxu0 0.0
        %401 = vmatpush1.msra.mxu0 0.0
        %402 = vmatprep.subr.mxu0 0.0
        %403 = vmatpush1.msra.mxu0 0.0
        %404 = vmatprep.subr.mxu0 0.0
        %405 = vmatpush1.msra.mxu0 0.0
        %406 = vmatprep.subr.mxu0 0.0
        %407 = vmatpush1.msra.mxu0 0.0
        %408 = vmatprep.subr.mxu0 0.0
        %409 = vmatpush1.msra.mxu0 0.0
        %410 = vmatprep.subr.mxu0 0.0
        %411 = vmatpush1.msra.mxu0 0.0
        %412 = vmatprep.subr.mxu0 0.0
        %413 = vmatpush1.msra.mxu0 0.0
        %414 = vmatprep.subr.mxu0 0.0
        %415 = vmatpush1.msra.mxu0 0.0
        %416 = vmatprep.subr.mxu0 0.0
        %417 = vmatpush1.msra.mxu0 0.0
        %418 = vmatprep.subr.mxu0 0.0
        %419 = vmatpush1.msra.mxu0 0.0
        %420 = vmatprep.subr.mxu0 0.0
        %421 = vmatpush1.msra.mxu0 0.0
        %422 = vmatprep.subr.mxu0 0.0
        %423 = vmatpush1.msra.mxu0 0.0
        %424 = vmatprep.subr.mxu0 0.0
        %425 = vmatpush1.msra.mxu0 0.0
        %426 = vmatprep.subr.mxu0 0.0
        %427 = vmatpush1.msra.mxu0 0.0
        %428 = vmatprep.subr.mxu0 0.0
        %429 = vmatpush1.msra.mxu0 0.0
        %430 = vmatprep.subr.mxu0 0.0
        %431 = vmatpush1.msra.mxu0 0.0
        %432 = vmatprep.subr.mxu0 0.0
        %433 = vmatpush1.msra.mxu0 0.0
        %434 = vmatprep.subr.mxu0 0.0
        %435 = vmatpush1.msra.mxu0 0.0
        %436 = vmatprep.subr.mxu0 0.0
        %437 = vmatpush1.msra.mxu0 0.0
        %438 = vmatprep.subr.mxu0 0.0
        %439 = vmatpush1.msra.mxu0 0.0
        %440 = vmatprep.subr.mxu0 0.0
        %441 = vmatpush1.msra.mxu0 0.0
        %442 = vmatprep.subr.mxu0 0.0
        %443 = vmatpush1.msra.mxu0 0.0
        %444 = vmatprep.subr.mxu0 0.0
        %445 = vmatpush1.msra.mxu0 0.0
        %446 = vmatprep.subr.mxu0 0.0
        %447 = vmatpush1.msra.mxu0 0.0
        %448 = vmatprep.subr.mxu0 0.0
        %449 = vmatpush1.msra.mxu0 0.0
        %450 = vmatprep.subr.mxu0 0.0
        %451 = vmatpush1.msra.mxu0 0.0
        %452 = vmatprep.mubr.f32.mxu0 0.0
        %453 = vmatmul.mubr.f32.gmra.mrb[0].mxu0 %v386
        %v454 = vpop.f32.mrb[0].mxu0
        %v455 = vadd.f32 %v383, %v454
        %v456 = vpop.f32.mrb[0].mxu0
        %v457 = vadd.f32 %v384, %v456
        %458 = vdwg.mxu0
        %vm459 = vcmp.eq.s32.totalorder %v372, 255
        %vm460 = vcmp.eq.s32.totalorder %v373, 255
        %461 = vrot.lane.b32.xlu0 %v367, 127
        %v462 = vpop.permute.xlu0 %461
        %463 = vrot.lane.b32.xlu0 %v369, 127
        %v464 = vpop.permute.xlu0 %463
        %vm465 = vcmp.lt.s32.totalorder %v372, 127
        %v466 = vsel %vm465, %v462, %v464
        %v467 = vsel %vm465, %v464, %v462
        %v468 = vsel %vm459, 0.0, %v466
        %v469 = vsel %vm460, 0.0, %v467
        %v470 = vadd.f32 %v455, %v468
        %v471 = vadd.f32 %v457, %v469
        %472 = vst [vmem:[%s210] sm:$0xff] %v470
        %473 = vst [vmem:[%s210 + $0x8] sm:$0xff] %v471
        %v474 = vadd.f32 %v470, %v471
        %475 = vadd.xlane.f32.xlu0 %v474
        %v476 = vpop.xlane.xlu0 %475
        %v477 = vmul.f32 %v470, %v470
        %v478 = vmul.f32 %v471, %v471
        %v479 = vadd.f32 %v477, %v478
        %480 = vadd.xlane.f32.xlu0 %v479
        %v481 = vpop.xlane.xlu0 %480
        %vm482 = vcmask 7168
        %v483 = vsel %vm482, %v476, %v481
        %vm484 = vcmask 15360
        %485 = vst.msk [vmem:[%s214] sm:$0xff] %vm484, %v483
        %p486 = scmp.lt.s32.totalorder %s19, 1
        %s487 = scalar_select %p486, %s19, 1
        %s488 = smul.addr %s487, 2
        %s489 = smul.addr %s488, 8
        %s490 = scalar_lea.vmem %s2, %s489
        %p491 = scmp.lt.s32.totalorder %s19, 1
        %s492 = scalar_select %p491, %s19, 1
        %s493 = smul.addr %s492, 8
        %s494 = scalar_lea.vmem %s3, %s493
        // Predicated region
        $region37: #{basic_block_1d.3} parent=27 // pred_check
          %p495 = pneg %p84
        $region38: #{basic_block_1d.3} parent=27 // pred_check_branch
          %497 = sbr.rel (%p495) target = $region40
        $region39: #{basic_block_1d.3} parent=27 // pred_region
          _
        $region40: #{basic_block_1d.3} parent=27 // pred_fallthru
          _
        // Predicated region
        $region41: #{basic_block_1d.3} parent=27 // pred_check
          %p498 = pneg %p110
        $region42: #{basic_block_1d.3} parent=27 // pred_check_branch
          %500 = sbr.rel (%p498) target = $region44
        $region43: #{basic_block_1d.3} parent=27 // pred_region
          _
        $region44: #{basic_block_1d.3} parent=27 // pred_fallthru
          _
      $region28: #{basic_block_1d.3} parent=5 // pred_fallthru
        _
      %p501 = scmp.le.s32.totalorder 2, %s14
      // Predicated region
      $region45: #{basic_block_1d.3} parent=5 // pred_check
        %p502 = pneg %p501
      $region46: #{basic_block_1d.3} parent=5 // pred_check_branch
        %504 = sbr.rel (%p502) target = $region48
      $region47: #{basic_block_1d.3} parent=5 // pred_region
        %s505 = ssub.s32 %s14, 2
        // Predicated region
        $region49: #{basic_block_1d.3} parent=47 // pred_check
          %p506 = pneg %p90
        $region50: #{basic_block_1d.3} parent=47 // pred_check_branch
          %508 = sbr.rel (%p506) target = $region52
        $region51: #{basic_block_1d.3} parent=47 // pred_region
          %p509 = scmp.lt.s32.totalorder %s20, 1
          %s510 = scalar_select %p509, %s20, 1
          %s511 = smul.addr %s510, 2
          %s512 = smul.addr %s511, 8
          %s513 = scalar_lea.vmem %s2, %s512
        $region52: #{basic_block_1d.3} parent=47 // pred_fallthru
          _
        // Predicated region
        $region53: #{basic_block_1d.3} parent=47 // pred_check
          %p514 = pneg %p116
        $region54: #{basic_block_1d.3} parent=47 // pred_check_branch
          %516 = sbr.rel (%p514) target = $region56
        $region55: #{basic_block_1d.3} parent=47 // pred_region
          %p517 = scmp.lt.s32.totalorder %s20, 1
          %s518 = scalar_select %p517, %s20, 1
          %s519 = smul.addr %s518, 8
          %s520 = scalar_lea.vmem %s3, %s519
        $region56: #{basic_block_1d.3} parent=47 // pred_fallthru
          _
      $region48: #{basic_block_1d.3} parent=5 // pred_fallthru
        _
    $region6: #{basic_block_1d.3} parent=1 // loop_footer
      %s18 = sadd.s32 1, %s14
    $region7: #{basic_block_1d.3} parent=1 // loop_footer_branch
      %13 = sbr.rel target = $region3
    $region8: #{basic_block_1d.3} parent=1 // loop_exit
      _
    %521 = vsyncpa [#allocation3], 1
    %s522 = scalar_lea.sflag [#allocation3], 1
    %523 = vsyncpa %s522, 1
    %524 = vsyncpa [#allocation5], 1

// kernel: basic_block_1d.4
$region0: #{basic_block_1d.4}
  #allocation0 [shape = 'u32[]', space=smem, size = 0x4, offset = 0x4, fixed_abs, tag = 'smem constant byte address 0x4 - core index']
  #allocation1 [shape = 'u32[144,128]{1,0:T(1,128)}', space=vmem, size = 0x12000, scoped, tag = 'internal scratch']
  %s0 = inlined_call_operand.vmem [shape: f32[2,8,256], index: 0, kind: input, shape index: {}]
  %s1 = inlined_call_operand.vmem [shape: f32[8,1], index: 1, kind: input, shape index: {}]
  %s2 = inlined_call_operand.vmem [shape: f32[8,1], index: 2, kind: input, shape index: {}]
  %s3 = inlined_call_operand.vmem [shape: f32[3,8,8], index: 3, kind: input, shape index: {}]
  %s4 = inlined_call_operand.vmem [shape: f32[2,8,256], index: 4, kind: output, shape index: {0}]
  %s5 = inlined_call_operand.vmem [shape: f32[2,1,8,2], index: 5, kind: output, shape index: {1}]
  %6 = xla_tuple %s4, %s5
  %s7 = sld [smem:[#allocation0]]
  $region57: #{basic_block_1d.4} parent=0
    _
  %s9 = ssub.s32 1, %s7
  %s10 = scalar_select 0, %s9, %s7
  loop: start=0, step=1, limit=4
  $region2: #{basic_block_1d.4} parent=0 // loop_pre_header
    _
  $region3: #{basic_block_1d.4} parent=0 // loop_header
    %s12 = sphi 0, %s16
    %p13 = scmp.ge.s32.totalorder %s12, 4
    %s22 = sphi 0, %s24
    %s25 = sphi 0, %s22
    %s26 = sphi 0, %s25
    %s42 = sphi 0, %s26
    %s46 = sphi 0, %s46
    %s48 = sphi 0, %s46
    %s49 = sphi 0, %s48
    %s63 = sphi 0, %s49
    %s67 = sphi 0, %s67
    %s69 = sphi 0, %s67
    %s70 = sphi 0, %s69
    %s84 = sphi 0, %s70
    %s88 = sphi 0, %s88
    %s90 = sphi 0, %s88
    %s91 = sphi 0, %s90
    %s105 = sphi 0, %s91
    %s111 = sphi 0, %s113
    %s114 = sphi 0, %s111
    %s115 = sphi 0, %s114
    %s131 = sphi 0, %s115
    %s137 = sphi 0, %s139
    %s140 = sphi 0, %s137
    %s141 = sphi 0, %s140
    %s157 = sphi 0, %s141
  $region4: #{basic_block_1d.4} parent=0 // loop_header_branch
    %15 = sbr.rel (%p13) target = $region8
  $region5: #{basic_block_1d.4} parent=0 // loop_body
    %s17 = ssub.s32 %s12, 1
    %s18 = ssub.s32 %s12, 2
    %s19 = sadd.s32 %s12, 1
    %s20 = ssub.s32 %s12, %s19
    %p21 = scmp.eq.s32.totalorder %s20, 0
    %s23 = sadd.s32 %s22, 1
    %s24 = scalar_select %p21, %s22, %s23
    %p27 = pneg %p21
    %p28 = scmp.eq.s32.totalorder %s12, 1
    %p29 = por %p27, %p28
    %p30 = scmp.ne.s32.totalorder %s22, %s25
    %p31 = scmp.eq.s32.totalorder %s12, 0
    %p32 = por %p30, %p31
    %p33 = scmp.ne.s32.totalorder %s22, %s25
    %p34 = scmp.eq.s32.totalorder %s17, 1
    %p35 = por %p33, %p34
    %p36 = scmp.ne.s32.totalorder %s25, %s26
    %p37 = scmp.eq.s32.totalorder %s17, 0
    %p38 = por %p36, %p37
    %p39 = scmp.ne.s32.totalorder %s25, %s26
    %p40 = scmp.eq.s32.totalorder %s18, 1
    %p41 = por %p39, %p40
    %p43 = scmp.ne.s32.totalorder %s26, %s42
    %p44 = scmp.eq.s32.totalorder %s18, 0
    %p45 = por %p43, %p44
    %s47 = sadd.s32 %s46, 1
    %p50 = scmp.eq.s32.totalorder %s12, 1
    %p51 = scmp.ne.s32.totalorder %s46, %s48
    %p52 = scmp.eq.s32.totalorder %s12, 0
    %p53 = por %p51, %p52
    %p54 = scmp.ne.s32.totalorder %s46, %s48
    %p55 = scmp.eq.s32.totalorder %s17, 1
    %p56 = por %p54, %p55
    %p57 = scmp.ne.s32.totalorder %s48, %s49
    %p58 = scmp.eq.s32.totalorder %s17, 0
    %p59 = por %p57, %p58
    %p60 = scmp.ne.s32.totalorder %s48, %s49
    %p61 = scmp.eq.s32.totalorder %s18, 1
    %p62 = por %p60, %p61
    %p64 = scmp.ne.s32.totalorder %s49, %s63
    %p65 = scmp.eq.s32.totalorder %s18, 0
    %p66 = por %p64, %p65
    %s68 = sadd.s32 %s67, 1
    %p71 = scmp.eq.s32.totalorder %s12, 1
    %p72 = scmp.ne.s32.totalorder %s67, %s69
    %p73 = scmp.eq.s32.totalorder %s12, 0
    %p74 = por %p72, %p73
    %p75 = scmp.ne.s32.totalorder %s67, %s69
    %p76 = scmp.eq.s32.totalorder %s17, 1
    %p77 = por %p75, %p76
    %p78 = scmp.ne.s32.totalorder %s69, %s70
    %p79 = scmp.eq.s32.totalorder %s17, 0
    %p80 = por %p78, %p79
    %p81 = scmp.ne.s32.totalorder %s69, %s70
    %p82 = scmp.eq.s32.totalorder %s18, 1
    %p83 = por %p81, %p82
    %p85 = scmp.ne.s32.totalorder %s70, %s84
    %p86 = scmp.eq.s32.totalorder %s18, 0
    %p87 = por %p85, %p86
    %s89 = sadd.s32 %s88, 1
    %p92 = scmp.eq.s32.totalorder %s12, 1
    %p93 = scmp.ne.s32.totalorder %s88, %s90
    %p94 = scmp.eq.s32.totalorder %s12, 0
    %p95 = por %p93, %p94
    %p96 = scmp.ne.s32.totalorder %s88, %s90
    %p97 = scmp.eq.s32.totalorder %s17, 1
    %p98 = por %p96, %p97
    %p99 = scmp.ne.s32.totalorder %s90, %s91
    %p100 = scmp.eq.s32.totalorder %s17, 0
    %p101 = por %p99, %p100
    %p102 = scmp.ne.s32.totalorder %s90, %s91
    %p103 = scmp.eq.s32.totalorder %s18, 1
    %p104 = por %p102, %p103
    %p106 = scmp.ne.s32.totalorder %s91, %s105
    %p107 = scmp.eq.s32.totalorder %s18, 0
    %p108 = por %p106, %p107
    %s109 = ssub.s32 %s12, %s19
    %p110 = scmp.eq.s32.totalorder %s109, 0
    %s112 = sadd.s32 %s111, 1
    %s113 = scalar_select %p110, %s111, %s112
    %p116 = pneg %p110
    %p117 = scmp.eq.s32.totalorder %s12, 1
    %p118 = por %p116, %p117
    %p119 = scmp.ne.s32.totalorder %s111, %s114
    %p120 = scmp.eq.s32.totalorder %s12, 0
    %p121 = por %p119, %p120
    %p122 = scmp.ne.s32.totalorder %s111, %s114
    %p123 = scmp.eq.s32.totalorder %s17, 1
    %p124 = por %p122, %p123
    %p125 = scmp.ne.s32.totalorder %s114, %s115
    %p126 = scmp.eq.s32.totalorder %s17, 0
    %p127 = por %p125, %p126
    %p128 = scmp.ne.s32.totalorder %s114, %s115
    %p129 = scmp.eq.s32.totalorder %s18, 1
    %p130 = por %p128, %p129
    %p132 = scmp.ne.s32.totalorder %s115, %s131
    %p133 = scmp.eq.s32.totalorder %s18, 0
    %p134 = por %p132, %p133
    %s135 = ssub.s32 %s12, %s19
    %p136 = scmp.eq.s32.totalorder %s135, 0
    %s138 = sadd.s32 %s137, 1
    %s139 = scalar_select %p136, %s137, %s138
    %p142 = pneg %p136
    %p143 = scmp.eq.s32.totalorder %s12, 1
    %p144 = por %p142, %p143
    %p145 = scmp.ne.s32.totalorder %s137, %s140
    %p146 = scmp.eq.s32.totalorder %s12, 0
    %p147 = por %p145, %p146
    %p148 = scmp.ne.s32.totalorder %s137, %s140
    %p149 = scmp.eq.s32.totalorder %s17, 1
    %p150 = por %p148, %p149
    %p151 = scmp.ne.s32.totalorder %s140, %s141
    %p152 = scmp.eq.s32.totalorder %s17, 0
    %p153 = por %p151, %p152
    %p154 = scmp.ne.s32.totalorder %s140, %s141
    %p155 = scmp.eq.s32.totalorder %s18, 1
    %p156 = por %p154, %p155
    %p158 = scmp.ne.s32.totalorder %s141, %s157
    %p159 = scmp.eq.s32.totalorder %s18, 0
    %p160 = por %p158, %p159
    %p161 = scmp.le.s32.totalorder 1, %s12
    %p162 = scmp.lt.s32.totalorder %s12, 3
    %p163 = pnand %p161, %p162
    %p164 = pneg %p163
    // Predicated region
    $region9: #{basic_block_1d.4} parent=5 // pred_check
      _
    $region10: #{basic_block_1d.4} parent=5 // pred_check_branch
      %166 = sbr.rel (%p163) target = $region12
    $region11: #{basic_block_1d.4} parent=5 // pred_region
      %s167 = ssub.s32 %s12, 1
      // Predicated region
      $region13: #{basic_block_1d.4} parent=11 // pred_check
        %p168 = pneg %p59
      $region14: #{basic_block_1d.4} parent=11 // pred_check_branch
        %170 = sbr.rel (%p168) target = $region16
      $region15: #{basic_block_1d.4} parent=11 // pred_region
        _
      $region16: #{basic_block_1d.4} parent=11 // pred_fallthru
        _
      // Predicated region
      $region17: #{basic_block_1d.4} parent=11 // pred_check
        %p171 = pneg %p80
      $region18: #{basic_block_1d.4} parent=11 // pred_check_branch
        %173 = sbr.rel (%p171) target = $region20
      $region19: #{basic_block_1d.4} parent=11 // pred_region
        _
      $region20: #{basic_block_1d.4} parent=11 // pred_fallthru
        _
      // Predicated region
      $region21: #{basic_block_1d.4} parent=11 // pred_check
        %p174 = pneg %p101
      $region22: #{basic_block_1d.4} parent=11 // pred_check_branch
        %176 = sbr.rel (%p174) target = $region24
      $region23: #{basic_block_1d.4} parent=11 // pred_region
        _
      $region24: #{basic_block_1d.4} parent=11 // pred_fallthru
        _
    $region12: #{basic_block_1d.4} parent=5 // pred_fallthru
      _
    %p177 = scmp.lt.s32.totalorder %s12, 2
    // Predicated region
    $region25: #{basic_block_1d.4} parent=5 // pred_check
      %p178 = pneg %p177
    $region26: #{basic_block_1d.4} parent=5 // pred_check_branch
      %180 = sbr.rel (%p178) target = $region28
    $region27: #{basic_block_1d.4} parent=5 // pred_region
      // Predicated region
      $region29: #{basic_block_1d.4} parent=27 // pred_check
        %p181 = pneg %p32
      $region30: #{basic_block_1d.4} parent=27 // pred_check_branch
        %183 = sbr.rel (%p181) target = $region32
      $region31: #{basic_block_1d.4} parent=27 // pred_region
        %p184 = scmp.lt.s32.totalorder %s12, 1
        %s185 = scalar_select %p184, %s12, 1
        %s186 = smul.addr %s185, 2
        %s187 = smul.addr %s186, 8
        %s188 = scalar_lea.vmem %s0, %s187
      $region32: #{basic_block_1d.4} parent=27 // pred_fallthru
        _
    $region28: #{basic_block_1d.4} parent=5 // pred_fallthru
      _
    %p189 = scmp.le.s32.totalorder 1, %s12
    %p190 = scmp.lt.s32.totalorder %s12, 3
    %p191 = pnand %p189, %p190
    %p192 = pneg %p191
    // Predicated region
    $region33: #{basic_block_1d.4} parent=5 // pred_check
      _
    $region34: #{basic_block_1d.4} parent=5 // pred_check_branch
      %194 = sbr.rel (%p191) target = $region36
    $region35: #{basic_block_1d.4} parent=5 // pred_region
      %s195 = ssub.s32 %s12, 1
      %p196 = scmp.lt.s32.totalorder %s17, 1
      %s197 = scalar_select %p196, %s17, 1
      %s198 = smul.addr %s197, 2
      %s199 = smul.addr %s198, 8
      %s200 = scalar_lea.vmem %s0, %s199
      %p201 = pneg %p38
      %p202 = pneg %p35
      %p203 = pneg %p59
      %p204 = pneg %p56
      %p205 = pneg %p80
      %p206 = pneg %p77
      %p207 = pneg %p101
      %p208 = pneg %p98
      %p209 = pneg %p127
      %p210 = pneg %p124
      %p211 = scmp.lt.s32.totalorder %s17, 1
      %s212 = scalar_select %p211, %s17, 1
      %s213 = smul.addr %s212, 2
      %s214 = smul.addr %s213, 8
      %s215 = scalar_lea.vmem %s4, %s214
      %p216 = pneg %p153
      %p217 = pneg %p150
      %p218 = scmp.lt.s32.totalorder %s17, 1
      %s219 = scalar_select %p218, %s17, 1
      %s220 = smul.addr %s219, 8
      %s221 = scalar_lea.vmem %s5, %s220
      %p222 = scmp.lt.s32.totalorder %s17, 1
      %s223 = scalar_select %p222, %s17, 1
      %s224 = smul.addr %s223, 2
      %s225 = smul.addr %s224, 8
      %s226 = scalar_lea.vmem %s0, %s225
      %p227 = scmp.lt.s32.totalorder %s17, 1
      %s228 = scalar_select %p227, %s17, 1
      %s229 = smul.addr %s228, 2
      %s230 = smul.addr %s229, 8
      %s231 = scalar_lea.vmem %s4, %s230
      %p232 = scmp.lt.s32.totalorder %s17, 1
      %s233 = scalar_select %p232, %s17, 1
      %s234 = smul.addr %s233, 8
      %s235 = scalar_lea.vmem %s5, %s234
      %v236 = vld [vmem:[%s226] sm:$0xff]
      %v237 = vld [vmem:[%s226 + $0x8] sm:$0xff]
      %v238 = vld [vmem:[%s1] sm:$0xff]
      %240 = vset.pattern.permute.xlu0 0
      %241 = vperm.xlu0 %240, %v238
      %v242 = vpop.permute.xlu0 %241
      %v244 = vmul.f32 %v236, %v242
      %v245 = vmul.f32 %v237, %v242
      %v246 = vld [vmem:[%s2] sm:$0xff]
      %248 = vset.pattern.permute.xlu0 0
      %249 = vperm.xlu0 %248, %v246
      %v250 = vpop.permute.xlu0 %249
      %v252 = vadd.f32 %v244, %v250
      %v253 = vadd.f32 %v245, %v250
      %v254 = vmax.f32 %v252, 0.0
      %v255 = vmax.f32 %v253, 0.0
      %v256 = vld [vmem:[%s3] sm:$0xff]
      %vm257 = vcmask 64512
      %v259 = vsel %vm257, %v256, 0
      %261 = vmatprep.subr.mxu0 %v255
      %262 = vmatpush1.msra.mxu0 %v254
      %263 = vmatprep.subr.mxu0 0.0
      %264 = vmatpush1.msra.mxu0 0.0
      %265 = vmatprep.subr.mxu0 0.0
      %266 = vmatpush1.msra.mxu0 0.0
      %267 = vmatprep.subr.mxu0 0.0
      %268 = vmatpush1.msra.mxu0 0.0
      %269 = vmatprep.subr.mxu0 0.0
      %270 = vmatpush1.msra.mxu0 0.0
      %271 = vmatprep.subr.mxu0 0.0
      %272 = vmatpush1.msra.mxu0 0.0
      %273 = vmatprep.subr.mxu0 0.0
      %274 = vmatpush1.msra.mxu0 0.0
      %275 = vmatprep.subr.mxu0 0.0
      %276 = vmatpush1.msra.mxu0 0.0
      %277 = vmatprep.subr.mxu0 0.0
      %278 = vmatpush1.msra.mxu0 0.0
      %279 = vmatprep.subr.mxu0 0.0
      %280 = vmatpush1.msra.mxu0 0.0
      %281 = vmatprep.subr.mxu0 0.0
      %282 = vmatpush1.msra.mxu0 0.0
      %283 = vmatprep.subr.mxu0 0.0
      %284 = vmatpush1.msra.mxu0 0.0
      %285 = vmatprep.subr.mxu0 0.0
      %286 = vmatpush1.msra.mxu0 0.0
      %287 = vmatprep.subr.mxu0 0.0
      %288 = vmatpush1.msra.mxu0 0.0
      %289 = vmatprep.subr.mxu0 0.0
      %290 = vmatpush1.msra.mxu0 0.0
      %291 = vmatprep.subr.mxu0 0.0
      %292 = vmatpush1.msra.mxu0 0.0
      %293 = vmatprep.subr.mxu0 0.0
      %294 = vmatpush1.msra.mxu0 0.0
      %295 = vmatprep.subr.mxu0 0.0
      %296 = vmatpush1.msra.mxu0 0.0
      %297 = vmatprep.subr.mxu0 0.0
      %298 = vmatpush1.msra.mxu0 0.0
      %299 = vmatprep.subr.mxu0 0.0
      %300 = vmatpush1.msra.mxu0 0.0
      %301 = vmatprep.subr.mxu0 0.0
      %302 = vmatpush1.msra.mxu0 0.0
      %303 = vmatprep.subr.mxu0 0.0
      %304 = vmatpush1.msra.mxu0 0.0
      %305 = vmatprep.subr.mxu0 0.0
      %306 = vmatpush1.msra.mxu0 0.0
      %307 = vmatprep.subr.mxu0 0.0
      %308 = vmatpush1.msra.mxu0 0.0
      %309 = vmatprep.subr.mxu0 0.0
      %310 = vmatpush1.msra.mxu0 0.0
      %311 = vmatprep.subr.mxu0 0.0
      %312 = vmatpush1.msra.mxu0 0.0
      %313 = vmatprep.subr.mxu0 0.0
      %314 = vmatpush1.msra.mxu0 0.0
      %315 = vmatprep.subr.mxu0 0.0
      %316 = vmatpush1.msra.mxu0 0.0
      %317 = vmatprep.subr.mxu0 0.0
      %318 = vmatpush1.msra.mxu0 0.0
      %319 = vmatprep.subr.mxu0 0.0
      %320 = vmatpush1.msra.mxu0 0.0
      %321 = vmatprep.subr.mxu0 0.0
      %322 = vmatpush1.msra.mxu0 0.0
      %323 = vmatprep.subr.mxu0 0.0
      %324 = vmatpush1.msra.mxu0 0.0
      %325 = vmatprep.mubr.f32.mxu0 0.0
      %326 = vmatmul.mubr.f32.gmra.mrb[0].mxu0 %v259
      %v327 = vpop.f32.mrb[0].mxu0
      %v328 = vadd.f32 0.0, %v327
      %v329 = vpop.f32.mrb[0].mxu0
      %v330 = vadd.f32 0.0, %v329
      %331 = vdwg.mxu0
      %s332 = scalar_lea.vmem %s3, 8
      %v333 = vld [vmem:[%s332] sm:$0xff]
      %s334 = scalar_lea.vmem %s3, 16
      %v335 = vld [vmem:[%s334] sm:$0xff]
      %v337 = vsel %vm257, %v335, 0
      %339 = vmatprep.subr.mxu0 %v255
      %340 = vmatpush1.msra.mxu0 %v254
      %341 = vmatprep.subr.mxu0 0.0
      %342 = vmatpush1.msra.mxu0 0.0
      %343 = vmatprep.subr.mxu0 0.0
      %344 = vmatpush1.msra.mxu0 0.0
      %345 = vmatprep.subr.mxu0 0.0
      %346 = vmatpush1.msra.mxu0 0.0
      %347 = vmatprep.subr.mxu0 0.0
      %348 = vmatpush1.msra.mxu0 0.0
      %349 = vmatprep.subr.mxu0 0.0
      %350 = vmatpush1.msra.mxu0 0.0
      %351 = vmatprep.subr.mxu0 0.0
      %352 = vmatpush1.msra.mxu0 0.0
      %353 = vmatprep.subr.mxu0 0.0
      %354 = vmatpush1.msra.mxu0 0.0
      %355 = vmatprep.subr.mxu0 0.0
      %356 = vmatpush1.msra.mxu0 0.0
      %357 = vmatprep.subr.mxu0 0.0
      %358 = vmatpush1.msra.mxu0 0.0
      %359 = vmatprep.subr.mxu0 0.0
      %360 = vmatpush1.msra.mxu0 0.0
      %361 = vmatprep.subr.mxu0 0.0
      %362 = vmatpush1.msra.mxu0 0.0
      %363 = vmatprep.subr.mxu0 0.0
      %364 = vmatpush1.msra.mxu0 0.0
      %365 = vmatprep.subr.mxu0 0.0
      %366 = vmatpush1.msra.mxu0 0.0
      %367 = vmatprep.subr.mxu0 0.0
      %368 = vmatpush1.msra.mxu0 0.0
      %369 = vmatprep.subr.mxu0 0.0
      %370 = vmatpush1.msra.mxu0 0.0
      %371 = vmatprep.subr.mxu0 0.0
      %372 = vmatpush1.msra.mxu0 0.0
      %373 = vmatprep.subr.mxu0 0.0
      %374 = vmatpush1.msra.mxu0 0.0
      %375 = vmatprep.subr.mxu0 0.0
      %376 = vmatpush1.msra.mxu0 0.0
      %377 = vmatprep.subr.mxu0 0.0
      %378 = vmatpush1.msra.mxu0 0.0
      %379 = vmatprep.subr.mxu0 0.0
      %380 = vmatpush1.msra.mxu0 0.0
      %381 = vmatprep.subr.mxu0 0.0
      %382 = vmatpush1.msra.mxu0 0.0
      %383 = vmatprep.subr.mxu0 0.0
      %384 = vmatpush1.msra.mxu0 0.0
      %385 = vmatprep.subr.mxu0 0.0
      %386 = vmatpush1.msra.mxu0 0.0
      %387 = vmatprep.subr.mxu0 0.0
      %388 = vmatpush1.msra.mxu0 0.0
      %389 = vmatprep.subr.mxu0 0.0
      %390 = vmatpush1.msra.mxu0 0.0
      %391 = vmatprep.subr.mxu0 0.0
      %392 = vmatpush1.msra.mxu0 0.0
      %393 = vmatprep.subr.mxu0 0.0
      %394 = vmatpush1.msra.mxu0 0.0
      %395 = vmatprep.subr.mxu0 0.0
      %396 = vmatpush1.msra.mxu0 0.0
      %397 = vmatprep.subr.mxu0 0.0
      %398 = vmatpush1.msra.mxu0 0.0
      %399 = vmatprep.subr.mxu0 0.0
      %400 = vmatpush1.msra.mxu0 0.0
      %401 = vmatprep.subr.mxu0 0.0
      %402 = vmatpush1.msra.mxu0 0.0
      %403 = vmatprep.mubr.f32.mxu0 0.0
      %404 = vmatmul.mubr.f32.gmra.mrb[0].mxu0 %v337
      %v405 = vpop.f32.mrb[0].mxu0
      %v406 = vadd.f32 0.0, %v405
      %v407 = vpop.f32.mrb[0].mxu0
      %v408 = vadd.f32 0.0, %v407
      %409 = vdwg.mxu0
      %v410 = vlaneseq
      %v411 = vand.u32 %v410, 127
      %v412 = vadd.s32 %v411, 128
      %vm413 = vcmp.eq.s32.totalorder %v411, 0
      %vm414 = vcmp.eq.s32.totalorder %v412, 0
      %415 = vrot.lane.b32.xlu0 %v328, 1
      %v416 = vpop.permute.xlu0 %415
      %417 = vrot.lane.b32.xlu0 %v330, 1
      %v418 = vpop.permute.xlu0 %417
      %vm419 = vcmp.lt.s32.totalorder %v411, 1
      %v420 = vsel %vm419, %v416, %v418
      %v421 = vsel %vm419, %v418, %v416
      %v422 = vsel %vm413, 0.0, %v421
      %v423 = vsel %vm414, 0.0, %v420
      %v425 = vsel %vm257, %v333, 0
      %427 = vmatprep.subr.mxu0 %v255
      %428 = vmatpush1.msra.mxu0 %v254
      %429 = vmatprep.subr.mxu0 0.0
      %430 = vmatpush1.msra.mxu0 0.0
      %431 = vmatprep.subr.mxu0 0.0
      %432 = vmatpush1.msra.mxu0 0.0
      %433 = vmatprep.subr.mxu0 0.0
      %434 = vmatpush1.msra.mxu0 0.0
      %435 = vmatprep.subr.mxu0 0.0
      %436 = vmatpush1.msra.mxu0 0.0
      %437 = vmatprep.subr.mxu0 0.0
      %438 = vmatpush1.msra.mxu0 0.0
      %439 = vmatprep.subr.mxu0 0.0
      %440 = vmatpush1.msra.mxu0 0.0
      %441 = vmatprep.subr.mxu0 0.0
      %442 = vmatpush1.msra.mxu0 0.0
      %443 = vmatprep.subr.mxu0 0.0
      %444 = vmatpush1.msra.mxu0 0.0
      %445 = vmatprep.subr.mxu0 0.0
      %446 = vmatpush1.msra.mxu0 0.0
      %447 = vmatprep.subr.mxu0 0.0
      %448 = vmatpush1.msra.mxu0 0.0
      %449 = vmatprep.subr.mxu0 0.0
      %450 = vmatpush1.msra.mxu0 0.0
      %451 = vmatprep.subr.mxu0 0.0
      %452 = vmatpush1.msra.mxu0 0.0
      %453 = vmatprep.subr.mxu0 0.0
      %454 = vmatpush1.msra.mxu0 0.0
      %455 = vmatprep.subr.mxu0 0.0
      %456 = vmatpush1.msra.mxu0 0.0
      %457 = vmatprep.subr.mxu0 0.0
      %458 = vmatpush1.msra.mxu0 0.0
      %459 = vmatprep.subr.mxu0 0.0
      %460 = vmatpush1.msra.mxu0 0.0
      %461 = vmatprep.subr.mxu0 0.0
      %462 = vmatpush1.msra.mxu0 0.0
      %463 = vmatprep.subr.mxu0 0.0
      %464 = vmatpush1.msra.mxu0 0.0
      %465 = vmatprep.subr.mxu0 0.0
      %466 = vmatpush1.msra.mxu0 0.0
      %467 = vmatprep.subr.mxu0 0.0
      %468 = vmatpush1.msra.mxu0 0.0
      %469 = vmatprep.subr.mxu0 0.0
      %470 = vmatpush1.msra.mxu0 0.0
      %471 = vmatprep.subr.mxu0 0.0
      %472 = vmatpush1.msra.mxu0 0.0
      %473 = vmatprep.subr.mxu0 0.0
      %474 = vmatpush1.msra.mxu0 0.0
      %475 = vmatprep.subr.mxu0 0.0
      %476 = vmatpush1.msra.mxu0 0.0
      %477 = vmatprep.subr.mxu0 0.0
      %478 = vmatpush1.msra.mxu0 0.0
      %479 = vmatprep.subr.mxu0 0.0
      %480 = vmatpush1.msra.mxu0 0.0
      %481 = vmatprep.subr.mxu0 0.0
      %482 = vmatpush1.msra.mxu0 0.0
      %483 = vmatprep.subr.mxu0 0.0
      %484 = vmatpush1.msra.mxu0 0.0
      %485 = vmatprep.subr.mxu0 0.0
      %486 = vmatpush1.msra.mxu0 0.0
      %487 = vmatprep.subr.mxu0 0.0
      %488 = vmatpush1.msra.mxu0 0.0
      %489 = vmatprep.subr.mxu0 0.0
      %490 = vmatpush1.msra.mxu0 0.0
      %491 = vmatprep.mubr.f32.mxu0 0.0
      %492 = vmatmul.mubr.f32.gmra.mrb[0].mxu0 %v425
      %v493 = vpop.f32.mrb[0].mxu0
      %v494 = vadd.f32 %v422, %v493
      %v495 = vpop.f32.mrb[0].mxu0
      %v496 = vadd.f32 %v423, %v495
      %497 = vdwg.mxu0
      %vm498 = vcmp.eq.s32.totalorder %v411, 255
      %vm499 = vcmp.eq.s32.totalorder %v412, 255
      %500 = vrot.lane.b32.xlu0 %v406, 127
      %v501 = vpop.permute.xlu0 %500
      %502 = vrot.lane.b32.xlu0 %v408, 127
      %v503 = vpop.permute.xlu0 %502
      %vm504 = vcmp.lt.s32.totalorder %v411, 127
      %v505 = vsel %vm504, %v501, %v503
      %v506 = vsel %vm504, %v503, %v501
      %v507 = vsel %vm498, 0.0, %v505
      %v508 = vsel %vm499, 0.0, %v506
      %v509 = vadd.f32 %v494, %v507
      %v510 = vadd.f32 %v496, %v508
      %511 = vst [vmem:[%s231] sm:$0xff] %v509
      %512 = vst [vmem:[%s231 + $0x8] sm:$0xff] %v510
      %v513 = vadd.f32 %v509, %v510
      %514 = vadd.xlane.f32.xlu0 %v513
      %v515 = vpop.xlane.xlu0 %514
      %v516 = vmul.f32 %v509, %v509
      %v517 = vmul.f32 %v510, %v510
      %v518 = vadd.f32 %v516, %v517
      %519 = vadd.xlane.f32.xlu0 %v518
      %v520 = vpop.xlane.xlu0 %519
      %vm521 = vcmask 7168
      %v522 = vsel %vm521, %v515, %v520
      %vm523 = vcmask 15360
      %524 = vst.msk [vmem:[%s235] sm:$0xff] %vm523, %v522
      %p525 = scmp.lt.s32.totalorder %s17, 1
      %s526 = scalar_select %p525, %s17, 1
      %s527 = smul.addr %s526, 2
      %s528 = smul.addr %s527, 8
      %s529 = scalar_lea.vmem %s4, %s528
      %p530 = scmp.lt.s32.totalorder %s17, 1
      %s531 = scalar_select %p530, %s17, 1
      %s532 = smul.addr %s531, 8
      %s533 = scalar_lea.vmem %s5, %s532
      // Predicated region
      $region37: #{basic_block_1d.4} parent=35 // pred_check
        %p534 = pneg %p124
      $region38: #{basic_block_1d.4} parent=35 // pred_check_branch
        %536 = sbr.rel (%p534) target = $region40
      $region39: #{basic_block_1d.4} parent=35 // pred_region
        _
      $region40: #{basic_block_1d.4} parent=35 // pred_fallthru
        _
      // Predicated region
      $region41: #{basic_block_1d.4} parent=35 // pred_check
        %p537 = pneg %p150
      $region42: #{basic_block_1d.4} parent=35 // pred_check_branch
        %539 = sbr.rel (%p537) target = $region44
      $region43: #{basic_block_1d.4} parent=35 // pred_region
        _
      $region44: #{basic_block_1d.4} parent=35 // pred_fallthru
        _
    $region36: #{basic_block_1d.4} parent=5 // pred_fallthru
      _
    %p540 = scmp.le.s32.totalorder 2, %s12
    // Predicated region
    $region45: #{basic_block_1d.4} parent=5 // pred_check
      %p541 = pneg %p540
    $region46: #{basic_block_1d.4} parent=5 // pred_check_branch
      %543 = sbr.rel (%p541) target = $region48
    $region47: #{basic_block_1d.4} parent=5 // pred_region
      %s544 = ssub.s32 %s12, 2
      // Predicated region
      $region49: #{basic_block_1d.4} parent=47 // pred_check
        %p545 = pneg %p130
      $region50: #{basic_block_1d.4} parent=47 // pred_check_branch
        %547 = sbr.rel (%p545) target = $region52
      $region51: #{basic_block_1d.4} parent=47 // pred_region
        %p548 = scmp.lt.s32.totalorder %s18, 1
        %s549 = scalar_select %p548, %s18, 1
        %s550 = smul.addr %s549, 2
        %s551 = smul.addr %s550, 8
        %s552 = scalar_lea.vmem %s4, %s551
      $region52: #{basic_block_1d.4} parent=47 // pred_fallthru
        _
      // Predicated region
      $region53: #{basic_block_1d.4} parent=47 // pred_check
        %p553 = pneg %p156
      $region54: #{basic_block_1d.4} parent=47 // pred_check_branch
        %555 = sbr.rel (%p553) target = $region56
      $region55: #{basic_block_1d.4} parent=47 // pred_region
        %p556 = scmp.lt.s32.totalorder %s18, 1
        %s557 = scalar_select %p556, %s18, 1
        %s558 = smul.addr %s557, 8
        %s559 = scalar_lea.vmem %s5, %s558
      $region56: #{basic_block_1d.4} parent=47 // pred_fallthru
        _
    $region48: #{basic_block_1d.4} parent=5 // pred_fallthru
      _
  $region6: #{basic_block_1d.4} parent=0 // loop_footer
    %s16 = sadd.s32 1, %s12
  $region7: #{basic_block_1d.4} parent=0 // loop_footer_branch
    %11 = sbr.rel target = $region3
  $region8: #{basic_block_1d.4} parent=0 // loop_exit
    _

</llo_original>
